<compile_context>
chip_gen: v5e
topology: v5e:2x2
jax: 0.10.0
libtpu: 0.0.40
codegen_flags: <defaults>
</compile_context>

<pallas_src>
import numpy as np
import jax
import jax.numpy as jnp
from jax import lax
from jax.experimental import pallas as pl
from jax.experimental.pallas import tpu as pltpu

DX = 1.0 / 100
DT = 0.00025
NU_UP = 0.01
KS = 5                    # input_kernel_size (5x5 stencil)
HID = 16                  # hidden channels of the pi-block convs
KCOLS = 2 * KS * KS       # 50 true im2col columns (2 channels x 25 taps)
KPAD = 64                 # padded contraction dim (unmasked MXU operand loads)

LAP_2D_OP = np.array(
    [[0.0,     0.0,   -1.0 / 12, 0.0,     0.0],
     [0.0,     0.0,    4.0 / 3,  0.0,     0.0],
     [-1.0/12, 4.0/3, -5.0,      4.0/3,  -1.0/12],
     [0.0,     0.0,    4.0 / 3,  0.0,     0.0],
     [0.0,     0.0,   -1.0 / 12, 0.0,     0.0]], dtype=np.float64)


def make_params():
    """Deterministic synthetic parameters (shapes match the nn.Module)."""
    rng = np.random.RandomState(1234)
    ca = np.float32(rng.rand())
    cb = np.float32(rng.rand())

    def w(shape, scale=0.2):
        return rng.uniform(-scale, scale, size=shape).astype(np.float32)

    return dict(
        ca=ca, cb=cb,
        w_lap=(LAP_2D_OP / DX ** 2).astype(np.float32),          # (5,5) fixed stencil
        wh1_u=w((HID, 2, KS, KS)), bh1_u=w((HID,)),
        wh2_u=w((HID, 2, KS, KS)), bh2_u=w((HID,)),
        wh3_u=w((HID, 2, KS, KS)), bh3_u=w((HID,)),
        wh4_u=w((1, HID, 1, 1)),   bh4_u=w((1,)),
        wh1_v=w((HID, 2, KS, KS)), bh1_v=w((HID,)),
        wh2_v=w((HID, 2, KS, KS)), bh2_v=w((HID,)),
        wh3_v=w((HID, 2, KS, KS)), bh3_v=w((HID,)),
        wh4_v=w((1, HID, 1, 1)),   bh4_v=w((1,)),
    )


# ----------------------------------------------------------------------------
# Pallas kernel (per batch):
#   state_ref : (1, 2, Hf)   flat W-padded state, Hf = H*(W+4)
#   wall_ref  : (98, 64)     [wh1_u; wh1_v; wh2_u; wh2_v; wh3_u; wh3_v; lap_u; lap_v]
#   bconv_ref : (98, 1)      matching biases (0 for laplacian rows)
#   w4_ref    : (2, 32)      block-diag [wh4_u, 0; 0, wh4_v] 1x1 conv weights
#   b4_ref    : (2, 1)       wh4 biases
#   out_ref   : (1, 2, Hf)   next state on the same padded-flat layout
#   patches_ref (scratch)    (64, Hf) in-kernel im2col matrix
#
# Correctness of the flat circular shifts: for output column j in [2, W+1] of
# row y, tap (dy, dx) needs h[(y+dy-2) mod H, (x+dx-2) mod W]; with the state
# circularly padded in W only and flattened row-major over (H, W+4), a single
# circular roll of the flat axis by -((dy-2)*(W+4) + (dx-2)) delivers exactly
# that value (the H-wrap falls out of the modular flat roll; the W offset never
# crosses a row boundary because |dx-2| <= 2 and W is padded by 2 each side).
# Padding columns of the output contain garbage and are sliced away on host.
# ----------------------------------------------------------------------------
def _make_kernel(Hf, Wp):
    shifts = [-((dy - 2) * Wp + (dx - 2)) for dy in range(KS) for dx in range(KS)]

    def kernel(state_ref, wall_ref, bconv_ref, w4_ref, b4_ref, out_ref, patches_ref):
        f = state_ref[0]                                             # (2, Hf) f32

        # Zero the K-padding rows (50..63).  Done every step (scratch is
        # per-core; do NOT gate on program_id with "parallel" semantics).
        patches_ref[KCOLS:KPAD, :] = jnp.zeros((KPAD - KCOLS, Hf), jnp.float32)

        # In-kernel im2col: tap p = dy*5+dx -> rows [2p, 2p+1] are the two
        # channels of the circularly rolled flat state (roll done as two
        # static sliced stores; all VMEM traffic, no HBM blow-up).
        for p, s in enumerate(shifts):
            i = (-s) % Hf
            r = 2 * p
            if i == 0:
                patches_ref[r:r + 2, :] = f
            else:
                patches_ref[r:r + 2, 0:Hf - i] = f[:, i:Hf]
                patches_ref[r:r + 2, Hf - i:Hf] = f[:, 0:i]

        patches = patches_ref[...]                                   # (64, Hf)

        # All six 5x5 convs (2->16) AND both scaled laplacians: one MXU matmul.
        z = jnp.dot(wall_ref[...], patches,
                    preferred_element_type=jnp.float32) + bconv_ref[...]   # (98, Hf)

        # pi-block: [pi_u; pi_v] in one 32-row elementwise triple product.
        prod = z[0:32, :] * z[32:64, :] * z[64:96, :]                # (32, Hf)

        # Both 1x1 convs (16 -> 1) as one block-diagonal (2,32) matmul + bias.
        poly = jnp.dot(w4_ref[...], prod,
                       preferred_element_type=jnp.float32) + b4_ref[...]   # (2, Hf)

        res = z[96:98, :] + poly                                     # lap + pi term
        out_ref[0] = f + res * DT                                    # forward Euler

    return kernel


def percnn_forward(h, params):
    """h: (B, 2, H, W) float32, NCHW. Returns (B, 2, H, W)."""
    B, C, H, W = h.shape
    assert C == 2 and H >= 3 and W >= 2
    Wp = W + 4
    Hf = H * Wp

    # Circular pad along W only (the H wrap is handled exactly by the circular
    # flat shifts inside the kernel).  ~1.25x state traffic instead of 25x.
    hpadw = jnp.concatenate([h[..., W - 2:], h, h[..., :2]], axis=-1)    # (B,2,H,Wp)
    state = hpadw.reshape(B, 2, Hf).astype(jnp.float32)

    # ---- weight repack (host-side numpy, once) ----
    def im2col_w(w):   # (16,2,5,5) -> (16,50), col index = (dy*5+dx)*2 + cin
        return np.transpose(w, (0, 2, 3, 1)).reshape(HID, KCOLS)

    sig = lambda x: 1.0 / (1.0 + np.exp(-np.float64(x)))
    lap_flat = params["w_lap"].reshape(-1).astype(np.float64)            # (25,)

    wall = np.zeros((98, KPAD), np.float32)
    bconv = np.zeros((98, 1), np.float32)
    row_order = [("wh1_u", "bh1_u"), ("wh1_v", "bh1_v"),
                 ("wh2_u", "bh2_u"), ("wh2_v", "bh2_v"),
                 ("wh3_u", "bh3_u"), ("wh3_v", "bh3_v")]
    for i, (wk, bk) in enumerate(row_order):
        wall[i * HID:(i + 1) * HID, :KCOLS] = im2col_w(params[wk])
        bconv[i * HID:(i + 1) * HID, 0] = params[bk]
    # Laplacian rows, pre-scaled by nu_up * sigmoid(ca|cb); u uses even cols
    # (cin=0), v uses odd cols (cin=1).
    wall[96, 0:KCOLS:2] = (NU_UP * sig(params["ca"]) * lap_flat).astype(np.float32)
    wall[97, 1:KCOLS:2] = (NU_UP * sig(params["cb"]) * lap_flat).astype(np.float32)

    w4 = np.zeros((2, 2 * HID), np.float32)
    w4[0, :HID] = params["wh4_u"].reshape(HID)
    w4[1, HID:] = params["wh4_v"].reshape(HID)
    b4 = np.array([[params["bh4_u"][0]], [params["bh4_v"][0]]], np.float32)

    out = pl.pallas_call(
        _make_kernel(Hf, Wp),
        out_shape=jax.ShapeDtypeStruct((B, 2, Hf), jnp.float32),
        grid_spec=pltpu.PrefetchScalarGridSpec(
            num_scalar_prefetch=0,
            grid=(B,),
            in_specs=[
                pl.BlockSpec((1, 2, Hf),    lambda b: (b, 0, 0)),
                pl.BlockSpec((98, KPAD),    lambda b: (0, 0)),
                pl.BlockSpec((98, 1),       lambda b: (0, 0)),
                pl.BlockSpec((2, 2 * HID),  lambda b: (0, 0)),
                pl.BlockSpec((2, 1),        lambda b: (0, 0)),
            ],
            out_specs=pl.BlockSpec((1, 2, Hf), lambda b: (b, 0, 0)),
            scratch_shapes=[pltpu.VMEM((KPAD, Hf), jnp.float32)],
        ),
        compiler_params=pltpu.CompilerParams(
            dimension_semantics=("parallel",),
            # Sized with headroom for v7x's 64 MiB VMEM (v5e/v6e have 128 MiB).
            vmem_limit_bytes=48 * 1024 * 1024,
        ),
    )(state, jnp.asarray(wall), jnp.asarray(bconv), jnp.asarray(w4), jnp.asarray(b4))

    # Drop the W padding columns; the H wrap needed no padding at all.
    return out.reshape(B, 2, H, Wp)[:, :, :, 2:2 + W]


# ----------------------------------------------------------------------------
# Pure-JAX reference (mirrors the PyTorch forward) for validation.
# ----------------------------------------------------------------------------
def reference_forward(h, params):
    def conv(x, w, b=None):
        y = lax.conv_general_dilated(x, jnp.asarray(w, jnp.float32), (1, 1), "VALID",
                                     dimension_numbers=("NCHW", "OIHW", "NCHW"))
        if b is not None:
            y = y + jnp.asarray(b, jnp.float32).reshape(1, -1, 1, 1)
        return y

    hpad = jnp.pad(h, ((0, 0), (0, 0), (2, 2), (2, 2)), mode="wrap")
    u_pad, v_pad = hpad[:, 0:1], hpad[:, 1:2]
    u_prev, v_prev = h[:, 0:1], h[:, 1:2]
    w_lap = params["w_lap"].reshape(1, 1, KS, KS)
    sig = lambda x: 1.0 / (1.0 + np.exp(-np.float64(x)))

    u_res = (NU_UP * sig(params["ca"])) * conv(u_pad, w_lap) + conv(
        conv(hpad, params["wh1_u"], params["bh1_u"]) *
        conv(hpad, params["wh2_u"], params["bh2_u"]) *
        conv(hpad, params["wh3_u"], params["bh3_u"]),
        params["wh4_u"], params["bh4_u"])
    v_res = (NU_UP * sig(params["cb"])) * conv(v_pad, w_lap) + conv(
        conv(hpad, params["wh1_v"], params["bh1_v"]) *
        conv(hpad, params["wh2_v"], params["bh2_v"]) *
        conv(hpad, params["wh3_v"], params["bh3_v"]),
        params["wh4_v"], params["bh4_v"])

    u_next = u_prev + u_res * DT
    v_next = v_prev + v_res * DT
    return jnp.concatenate([u_next, v_next], axis=1)


if __name__ == "__main__":
    B, C, H, W = 2, 2, 16, 16
    key = jax.random.PRNGKey(0)
    h = jax.random.normal(key, (B, C, H, W), dtype=jnp.float32)

    params = make_params()

    out = jax.block_until_ready(percnn_forward(h, params))
    ref = jax.block_until_ready(reference_forward(h, params))

    assert out.shape == (B, 2, H, W) and out.dtype == jnp.float32
    np.testing.assert_allclose(np.asarray(out), np.asarray(ref), rtol=1e-2, atol=5e-3)
    print("KERNEL_OK")
</pallas_src>

<mosaic_0001>
module attributes {stable_mosaic.version = 11 : i64} {
  func.func @kernel(%arg0: i32, %arg1: memref<1x2x320xf32, #tpu.memory_space<vmem>>, %arg2: memref<98x64xf32, #tpu.memory_space<vmem>>, %arg3: memref<98x1xf32, #tpu.memory_space<vmem>>, %arg4: memref<2x32xf32, #tpu.memory_space<vmem>>, %arg5: memref<2x1xf32, #tpu.memory_space<vmem>>, %arg6: memref<1x2x320xf32, #tpu.memory_space<vmem>>, %arg7: memref<64x320xf32, #tpu.memory_space<vmem>>) attributes {dimension_semantics = [#tpu.dimension_semantics<parallel>], iteration_bounds = array<i64: 2>, scalar_prefetch = 0 : i64, scratch_operands = 1 : i64, tpu.core_type = #tpu.core_type<tc>, window_params = [{transform_indices = @transform_0, window_bounds = array<i64: 1, 2, 320>}, {pipeline_mode = #tpu.pipeline_mode<synchronous>, transform_indices = @transform_1, window_bounds = array<i64: 98, 64>}, {pipeline_mode = #tpu.pipeline_mode<synchronous>, transform_indices = @transform_2, window_bounds = array<i64: 98, 1>}, {pipeline_mode = #tpu.pipeline_mode<synchronous>, transform_indices = @transform_3, window_bounds = array<i64: 2, 32>}, {pipeline_mode = #tpu.pipeline_mode<synchronous>, transform_indices = @transform_4, window_bounds = array<i64: 2, 1>}, {transform_indices = @transform_5, window_bounds = array<i64: 1, 2, 320>}]} {
    %c0 = arith.constant 0 : index
    %c0_0 = arith.constant 0 : index
    %c0_1 = arith.constant 0 : index
    %0 = vector.load %arg1[%c0, %c0_0, %c0_1] : memref<1x2x320xf32, #tpu.memory_space<vmem>>, vector<1x2x320xf32>
    %1 = vector.shape_cast %0 : vector<1x2x320xf32> to vector<2x320xf32>
    %cst = arith.constant 0.000000e+00 : f32
    %2 = vector.broadcast %cst : f32 to vector<14x320xf32>
    %c50 = arith.constant 50 : index
    %c0_2 = arith.constant 0 : index
    %3 = vector.load %arg7[%c50, %c0_2] : memref<64x320xf32, #tpu.memory_space<vmem>>, vector<14x320xf32>
    tpu.vector_store %arg7[%c50, %c0_2], %2 {strides = array<i32>} : memref<64x320xf32, #tpu.memory_space<vmem>>, vector<14x320xf32>,
    %4 = vector.extract_strided_slice %1 {offsets = [0, 278], sizes = [2, 42], strides = [1, 1]} : vector<2x320xf32> to vector<2x42xf32>
    %c0_3 = arith.constant 0 : index
    %c0_4 = arith.constant 0 : index
    %5 = vector.load %arg7[%c0_3, %c0_4] : memref<64x320xf32, #tpu.memory_space<vmem>>, vector<2x42xf32>
    tpu.vector_store %arg7[%c0_3, %c0_4], %4 {strides = array<i32>} : memref<64x320xf32, #tpu.memory_space<vmem>>, vector<2x42xf32>,
    %6 = vector.extract_strided_slice %1 {offsets = [0, 0], sizes = [2, 278], strides = [1, 1]} : vector<2x320xf32> to vector<2x278xf32>
    %c0_5 = arith.constant 0 : index
    %c42 = arith.constant 42 : index
    %7 = vector.load %arg7[%c0_5, %c42] : memref<64x320xf32, #tpu.memory_space<vmem>>, vector<2x278xf32>
    tpu.vector_store %arg7[%c0_5, %c42], %6 {strides = array<i32>} : memref<64x320xf32, #tpu.memory_space<vmem>>, vector<2x278xf32>,
    %8 = vector.extract_strided_slice %1 {offsets = [0, 279], sizes = [2, 41], strides = [1, 1]} : vector<2x320xf32> to vector<2x41xf32>
    %c2 = arith.constant 2 : index
    %c0_6 = arith.constant 0 : index
    %9 = vector.load %arg7[%c2, %c0_6] : memref<64x320xf32, #tpu.memory_space<vmem>>, vector<2x41xf32>
    tpu.vector_store %arg7[%c2, %c0_6], %8 {strides = array<i32>} : memref<64x320xf32, #tpu.memory_space<vmem>>, vector<2x41xf32>,
    %10 = vector.extract_strided_slice %1 {offsets = [0, 0], sizes = [2, 279], strides = [1, 1]} : vector<2x320xf32> to vector<2x279xf32>
    %c2_7 = arith.constant 2 : index
    %c41 = arith.constant 41 : index
    %11 = vector.load %arg7[%c2_7, %c41] : memref<64x320xf32, #tpu.memory_space<vmem>>, vector<2x279xf32>
    tpu.vector_store %arg7[%c2_7, %c41], %10 {strides = array<i32>} : memref<64x320xf32, #tpu.memory_space<vmem>>, vector<2x279xf32>,
    %12 = vector.extract_strided_slice %1 {offsets = [0, 280], sizes = [2, 40], strides = [1, 1]} : vector<2x320xf32> to vector<2x40xf32>
    %c4 = arith.constant 4 : index
    %c0_8 = arith.constant 0 : index
    %13 = vector.load %arg7[%c4, %c0_8] : memref<64x320xf32, #tpu.memory_space<vmem>>, vector<2x40xf32>
    tpu.vector_store %arg7[%c4, %c0_8], %12 {strides = array<i32>} : memref<64x320xf32, #tpu.memory_space<vmem>>, vector<2x40xf32>,
    %14 = vector.extract_strided_slice %1 {offsets = [0, 0], sizes = [2, 280], strides = [1, 1]} : vector<2x320xf32> to vector<2x280xf32>
    %c4_9 = arith.constant 4 : index
    %c40 = arith.constant 40 : index
    %15 = vector.load %arg7[%c4_9, %c40] : memref<64x320xf32, #tpu.memory_space<vmem>>, vector<2x280xf32>
    tpu.vector_store %arg7[%c4_9, %c40], %14 {strides = array<i32>} : memref<64x320xf32, #tpu.memory_space<vmem>>, vector<2x280xf32>,
    %16 = vector.extract_strided_slice %1 {offsets = [0, 281], sizes = [2, 39], strides = [1, 1]} : vector<2x320xf32> to vector<2x39xf32>
    %c6 = arith.constant 6 : index
    %c0_10 = arith.constant 0 : index
    %17 = vector.load %arg7[%c6, %c0_10] : memref<64x320xf32, #tpu.memory_space<vmem>>, vector<2x39xf32>
    tpu.vector_store %arg7[%c6, %c0_10], %16 {strides = array<i32>} : memref<64x320xf32, #tpu.memory_space<vmem>>, vector<2x39xf32>,
    %18 = vector.extract_strided_slice %1 {offsets = [0, 0], sizes = [2, 281], strides = [1, 1]} : vector<2x320xf32> to vector<2x281xf32>
    %c6_11 = arith.constant 6 : index
    %c39 = arith.constant 39 : index
    %19 = vector.load %arg7[%c6_11, %c39] : memref<64x320xf32, #tpu.memory_space<vmem>>, vector<2x281xf32>
    tpu.vector_store %arg7[%c6_11, %c39], %18 {strides = array<i32>} : memref<64x320xf32, #tpu.memory_space<vmem>>, vector<2x281xf32>,
    %20 = vector.extract_strided_slice %1 {offsets = [0, 282], sizes = [2, 38], strides = [1, 1]} : vector<2x320xf32> to vector<2x38xf32>
    %c8 = arith.constant 8 : index
    %c0_12 = arith.constant 0 : index
    %21 = vector.load %arg7[%c8, %c0_12] : memref<64x320xf32, #tpu.memory_space<vmem>>, vector<2x38xf32>
    tpu.vector_store %arg7[%c8, %c0_12], %20 {strides = array<i32>} : memref<64x320xf32, #tpu.memory_space<vmem>>, vector<2x38xf32>,
    %22 = vector.extract_strided_slice %1 {offsets = [0, 0], sizes = [2, 282], strides = [1, 1]} : vector<2x320xf32> to vector<2x282xf32>
    %c8_13 = arith.constant 8 : index
    %c38 = arith.constant 38 : index
    %23 = vector.load %arg7[%c8_13, %c38] : memref<64x320xf32, #tpu.memory_space<vmem>>, vector<2x282xf32>
    tpu.vector_store %arg7[%c8_13, %c38], %22 {strides = array<i32>} : memref<64x320xf32, #tpu.memory_space<vmem>>, vector<2x282xf32>,
    %24 = vector.extract_strided_slice %1 {offsets = [0, 298], sizes = [2, 22], strides = [1, 1]} : vector<2x320xf32> to vector<2x22xf32>
    %c10 = arith.constant 10 : index
    %c0_14 = arith.constant 0 : index
    %25 = vector.load %arg7[%c10, %c0_14] : memref<64x320xf32, #tpu.memory_space<vmem>>, vector<2x22xf32>
    tpu.vector_store %arg7[%c10, %c0_14], %24 {strides = array<i32>} : memref<64x320xf32, #tpu.memory_space<vmem>>, vector<2x22xf32>,
    %26 = vector.extract_strided_slice %1 {offsets = [0, 0], sizes = [2, 298], strides = [1, 1]} : vector<2x320xf32> to vector<2x298xf32>
    %c10_15 = arith.constant 10 : index
    %c22 = arith.constant 22 : index
    %27 = vector.load %arg7[%c10_15, %c22] : memref<64x320xf32, #tpu.memory_space<vmem>>, vector<2x298xf32>
    tpu.vector_store %arg7[%c10_15, %c22], %26 {strides = array<i32>} : memref<64x320xf32, #tpu.memory_space<vmem>>, vector<2x298xf32>,
    %28 = vector.extract_strided_slice %1 {offsets = [0, 299], sizes = [2, 21], strides = [1, 1]} : vector<2x320xf32> to vector<2x21xf32>
    %c12 = arith.constant 12 : index
    %c0_16 = arith.constant 0 : index
    %29 = vector.load %arg7[%c12, %c0_16] : memref<64x320xf32, #tpu.memory_space<vmem>>, vector<2x21xf32>
    tpu.vector_store %arg7[%c12, %c0_16], %28 {strides = array<i32>} : memref<64x320xf32, #tpu.memory_space<vmem>>, vector<2x21xf32>,
    %30 = vector.extract_strided_slice %1 {offsets = [0, 0], sizes = [2, 299], strides = [1, 1]} : vector<2x320xf32> to vector<2x299xf32>
    %c12_17 = arith.constant 12 : index
    %c21 = arith.constant 21 : index
    %31 = vector.load %arg7[%c12_17, %c21] : memref<64x320xf32, #tpu.memory_space<vmem>>, vector<2x299xf32>
    tpu.vector_store %arg7[%c12_17, %c21], %30 {strides = array<i32>} : memref<64x320xf32, #tpu.memory_space<vmem>>, vector<2x299xf32>,
    %32 = vector.extract_strided_slice %1 {offsets = [0, 300], sizes = [2, 20], strides = [1, 1]} : vector<2x320xf32> to vector<2x20xf32>
    %c14 = arith.constant 14 : index
    %c0_18 = arith.constant 0 : index
    %33 = vector.load %arg7[%c14, %c0_18] : memref<64x320xf32, #tpu.memory_space<vmem>>, vector<2x20xf32>
    tpu.vector_store %arg7[%c14, %c0_18], %32 {strides = array<i32>} : memref<64x320xf32, #tpu.memory_space<vmem>>, vector<2x20xf32>,
    %34 = vector.extract_strided_slice %1 {offsets = [0, 0], sizes = [2, 300], strides = [1, 1]} : vector<2x320xf32> to vector<2x300xf32>
    %c14_19 = arith.constant 14 : index
    %c20 = arith.constant 20 : index
    %35 = vector.load %arg7[%c14_19, %c20] : memref<64x320xf32, #tpu.memory_space<vmem>>, vector<2x300xf32>
    tpu.vector_store %arg7[%c14_19, %c20], %34 {strides = array<i32>} : memref<64x320xf32, #tpu.memory_space<vmem>>, vector<2x300xf32>,
    %36 = vector.extract_strided_slice %1 {offsets = [0, 301], sizes = [2, 19], strides = [1, 1]} : vector<2x320xf32> to vector<2x19xf32>
    %c16 = arith.constant 16 : index
    %c0_20 = arith.constant 0 : index
    %37 = vector.load %arg7[%c16, %c0_20] : memref<64x320xf32, #tpu.memory_space<vmem>>, vector<2x19xf32>
    tpu.vector_store %arg7[%c16, %c0_20], %36 {strides = array<i32>} : memref<64x320xf32, #tpu.memory_space<vmem>>, vector<2x19xf32>,
    %38 = vector.extract_strided_slice %1 {offsets = [0, 0], sizes = [2, 301], strides = [1, 1]} : vector<2x320xf32> to vector<2x301xf32>
    %c16_21 = arith.constant 16 : index
    %c19 = arith.constant 19 : index
    %39 = vector.load %arg7[%c16_21, %c19] : memref<64x320xf32, #tpu.memory_space<vmem>>, vector<2x301xf32>
    tpu.vector_store %arg7[%c16_21, %c19], %38 {strides = array<i32>} : memref<64x320xf32, #tpu.memory_space<vmem>>, vector<2x301xf32>,
    %40 = vector.extract_strided_slice %1 {offsets = [0, 302], sizes = [2, 18], strides = [1, 1]} : vector<2x320xf32> to vector<2x18xf32>
    %c18 = arith.constant 18 : index
    %c0_22 = arith.constant 0 : index
    %41 = vector.load %arg7[%c18, %c0_22] : memref<64x320xf32, #tpu.memory_space<vmem>>, vector<2x18xf32>
    tpu.vector_store %arg7[%c18, %c0_22], %40 {strides = array<i32>} : memref<64x320xf32, #tpu.memory_space<vmem>>, vector<2x18xf32>,
    %42 = vector.extract_strided_slice %1 {offsets = [0, 0], sizes = [2, 302], strides = [1, 1]} : vector<2x320xf32> to vector<2x302xf32>
    %c18_23 = arith.constant 18 : index
    %c18_24 = arith.constant 18 : index
    %43 = vector.load %arg7[%c18_23, %c18_24] : memref<64x320xf32, #tpu.memory_space<vmem>>, vector<2x302xf32>
    tpu.vector_store %arg7[%c18_23, %c18_24], %42 {strides = array<i32>} : memref<64x320xf32, #tpu.memory_space<vmem>>, vector<2x302xf32>,
    %44 = vector.extract_strided_slice %1 {offsets = [0, 318], sizes = [2, 2], strides = [1, 1]} : vector<2x320xf32> to vector<2x2xf32>
    %c20_25 = arith.constant 20 : index
    %c0_26 = arith.constant 0 : index
    %45 = vector.load %arg7[%c20_25, %c0_26] : memref<64x320xf32, #tpu.memory_space<vmem>>, vector<2x2xf32>
    tpu.vector_store %arg7[%c20_25, %c0_26], %44 {strides = array<i32>} : memref<64x320xf32, #tpu.memory_space<vmem>>, vector<2x2xf32>,
    %46 = vector.extract_strided_slice %1 {offsets = [0, 0], sizes = [2, 318], strides = [1, 1]} : vector<2x320xf32> to vector<2x318xf32>
    %c20_27 = arith.constant 20 : index
    %c2_28 = arith.constant 2 : index
    %47 = vector.load %arg7[%c20_27, %c2_28] : memref<64x320xf32, #tpu.memory_space<vmem>>, vector<2x318xf32>
    tpu.vector_store %arg7[%c20_27, %c2_28], %46 {strides = array<i32>} : memref<64x320xf32, #tpu.memory_space<vmem>>, vector<2x318xf32>,
    %48 = vector.extract_strided_slice %1 {offsets = [0, 319], sizes = [2, 1], strides = [1, 1]} : vector<2x320xf32> to vector<2x1xf32>
    %c22_29 = arith.constant 22 : index
    %c0_30 = arith.constant 0 : index
    %49 = vector.load %arg7[%c22_29, %c0_30] : memref<64x320xf32, #tpu.memory_space<vmem>>, vector<2x1xf32>
    tpu.vector_store %arg7[%c22_29, %c0_30], %48 {strides = array<i32>} : memref<64x320xf32, #tpu.memory_space<vmem>>, vector<2x1xf32>,
    %50 = vector.extract_strided_slice %1 {offsets = [0, 0], sizes = [2, 319], strides = [1, 1]} : vector<2x320xf32> to vector<2x319xf32>
    %c22_31 = arith.constant 22 : index
    %c1 = arith.constant 1 : index
    %51 = vector.load %arg7[%c22_31, %c1] : memref<64x320xf32, #tpu.memory_space<vmem>>, vector<2x319xf32>
    tpu.vector_store %arg7[%c22_31, %c1], %50 {strides = array<i32>} : memref<64x320xf32, #tpu.memory_space<vmem>>, vector<2x319xf32>,
    %c24 = arith.constant 24 : index
    %c0_32 = arith.constant 0 : index
    %52 = vector.load %arg7[%c24, %c0_32] : memref<64x320xf32, #tpu.memory_space<vmem>>, vector<2x320xf32>
    tpu.vector_store %arg7[%c24, %c0_32], %1 {strides = array<i32>} : memref<64x320xf32, #tpu.memory_space<vmem>>, vector<2x320xf32>,
    %53 = vector.extract_strided_slice %1 {offsets = [0, 1], sizes = [2, 319], strides = [1, 1]} : vector<2x320xf32> to vector<2x319xf32>
    %c26 = arith.constant 26 : index
    %c0_33 = arith.constant 0 : index
    %54 = vector.load %arg7[%c26, %c0_33] : memref<64x320xf32, #tpu.memory_space<vmem>>, vector<2x319xf32>
    tpu.vector_store %arg7[%c26, %c0_33], %53 {strides = array<i32>} : memref<64x320xf32, #tpu.memory_space<vmem>>, vector<2x319xf32>,
    %55 = vector.extract_strided_slice %1 {offsets = [0, 0], sizes = [2, 1], strides = [1, 1]} : vector<2x320xf32> to vector<2x1xf32>
    %c26_34 = arith.constant 26 : index
    %c319 = arith.constant 319 : index
    %56 = vector.load %arg7[%c26_34, %c319] : memref<64x320xf32, #tpu.memory_space<vmem>>, vector<2x1xf32>
    tpu.vector_store %arg7[%c26_34, %c319], %55 {strides = array<i32>} : memref<64x320xf32, #tpu.memory_space<vmem>>, vector<2x1xf32>,
    %57 = vector.extract_strided_slice %1 {offsets = [0, 2], sizes = [2, 318], strides = [1, 1]} : vector<2x320xf32> to vector<2x318xf32>
    %c28 = arith.constant 28 : index
    %c0_35 = arith.constant 0 : index
    %58 = vector.load %arg7[%c28, %c0_35] : memref<64x320xf32, #tpu.memory_space<vmem>>, vector<2x318xf32>
    tpu.vector_store %arg7[%c28, %c0_35], %57 {strides = array<i32>} : memref<64x320xf32, #tpu.memory_space<vmem>>, vector<2x318xf32>,
    %59 = vector.extract_strided_slice %1 {offsets = [0, 0], sizes = [2, 2], strides = [1, 1]} : vector<2x320xf32> to vector<2x2xf32>
    %c28_36 = arith.constant 28 : index
    %c318 = arith.constant 318 : index
    %60 = vector.load %arg7[%c28_36, %c318] : memref<64x320xf32, #tpu.memory_space<vmem>>, vector<2x2xf32>
    tpu.vector_store %arg7[%c28_36, %c318], %59 {strides = array<i32>} : memref<64x320xf32, #tpu.memory_space<vmem>>, vector<2x2xf32>,
    %61 = vector.extract_strided_slice %1 {offsets = [0, 18], sizes = [2, 302], strides = [1, 1]} : vector<2x320xf32> to vector<2x302xf32>
    %c30 = arith.constant 30 : index
    %c0_37 = arith.constant 0 : index
    %62 = vector.load %arg7[%c30, %c0_37] : memref<64x320xf32, #tpu.memory_space<vmem>>, vector<2x302xf32>
    tpu.vector_store %arg7[%c30, %c0_37], %61 {strides = array<i32>} : memref<64x320xf32, #tpu.memory_space<vmem>>, vector<2x302xf32>,
    %63 = vector.extract_strided_slice %1 {offsets = [0, 0], sizes = [2, 18], strides = [1, 1]} : vector<2x320xf32> to vector<2x18xf32>
    %c30_38 = arith.constant 30 : index
    %c302 = arith.constant 302 : index
    %64 = vector.load %arg7[%c30_38, %c302] : memref<64x320xf32, #tpu.memory_space<vmem>>, vector<2x18xf32>
    tpu.vector_store %arg7[%c30_38, %c302], %63 {strides = array<i32>} : memref<64x320xf32, #tpu.memory_space<vmem>>, vector<2x18xf32>,
    %65 = vector.extract_strided_slice %1 {offsets = [0, 19], sizes = [2, 301], strides = [1, 1]} : vector<2x320xf32> to vector<2x301xf32>
    %c32 = arith.constant 32 : index
    %c0_39 = arith.constant 0 : index
    %66 = vector.load %arg7[%c32, %c0_39] : memref<64x320xf32, #tpu.memory_space<vmem>>, vector<2x301xf32>
    tpu.vector_store %arg7[%c32, %c0_39], %65 {strides = array<i32>} : memref<64x320xf32, #tpu.memory_space<vmem>>, vector<2x301xf32>,
    %67 = vector.extract_strided_slice %1 {offsets = [0, 0], sizes = [2, 19], strides = [1, 1]} : vector<2x320xf32> to vector<2x19xf32>
    %c32_40 = arith.constant 32 : index
    %c301 = arith.constant 301 : index
    %68 = vector.load %arg7[%c32_40, %c301] : memref<64x320xf32, #tpu.memory_space<vmem>>, vector<2x19xf32>
    tpu.vector_store %arg7[%c32_40, %c301], %67 {strides = array<i32>} : memref<64x320xf32, #tpu.memory_space<vmem>>, vector<2x19xf32>,
    %69 = vector.extract_strided_slice %1 {offsets = [0, 20], sizes = [2, 300], strides = [1, 1]} : vector<2x320xf32> to vector<2x300xf32>
    %c34 = arith.constant 34 : index
    %c0_41 = arith.constant 0 : index
    %70 = vector.load %arg7[%c34, %c0_41] : memref<64x320xf32, #tpu.memory_space<vmem>>, vector<2x300xf32>
    tpu.vector_store %arg7[%c34, %c0_41], %69 {strides = array<i32>} : memref<64x320xf32, #tpu.memory_space<vmem>>, vector<2x300xf32>,
    %71 = vector.extract_strided_slice %1 {offsets = [0, 0], sizes = [2, 20], strides = [1, 1]} : vector<2x320xf32> to vector<2x20xf32>
    %c34_42 = arith.constant 34 : index
    %c300 = arith.constant 300 : index
    %72 = vector.load %arg7[%c34_42, %c300] : memref<64x320xf32, #tpu.memory_space<vmem>>, vector<2x20xf32>
    tpu.vector_store %arg7[%c34_42, %c300], %71 {strides = array<i32>} : memref<64x320xf32, #tpu.memory_space<vmem>>, vector<2x20xf32>,
    %73 = vector.extract_strided_slice %1 {offsets = [0, 21], sizes = [2, 299], strides = [1, 1]} : vector<2x320xf32> to vector<2x299xf32>
    %c36 = arith.constant 36 : index
    %c0_43 = arith.constant 0 : index
    %74 = vector.load %arg7[%c36, %c0_43] : memref<64x320xf32, #tpu.memory_space<vmem>>, vector<2x299xf32>
    tpu.vector_store %arg7[%c36, %c0_43], %73 {strides = array<i32>} : memref<64x320xf32, #tpu.memory_space<vmem>>, vector<2x299xf32>,
    %75 = vector.extract_strided_slice %1 {offsets = [0, 0], sizes = [2, 21], strides = [1, 1]} : vector<2x320xf32> to vector<2x21xf32>
    %c36_44 = arith.constant 36 : index
    %c299 = arith.constant 299 : index
    %76 = vector.load %arg7[%c36_44, %c299] : memref<64x320xf32, #tpu.memory_space<vmem>>, vector<2x21xf32>
    tpu.vector_store %arg7[%c36_44, %c299], %75 {strides = array<i32>} : memref<64x320xf32, #tpu.memory_space<vmem>>, vector<2x21xf32>,
    %77 = vector.extract_strided_slice %1 {offsets = [0, 22], sizes = [2, 298], strides = [1, 1]} : vector<2x320xf32> to vector<2x298xf32>
    %c38_45 = arith.constant 38 : index
    %c0_46 = arith.constant 0 : index
    %78 = vector.load %arg7[%c38_45, %c0_46] : memref<64x320xf32, #tpu.memory_space<vmem>>, vector<2x298xf32>
    tpu.vector_store %arg7[%c38_45, %c0_46], %77 {strides = array<i32>} : memref<64x320xf32, #tpu.memory_space<vmem>>, vector<2x298xf32>,
    %79 = vector.extract_strided_slice %1 {offsets = [0, 0], sizes = [2, 22], strides = [1, 1]} : vector<2x320xf32> to vector<2x22xf32>
    %c38_47 = arith.constant 38 : index
    %c298 = arith.constant 298 : index
    %80 = vector.load %arg7[%c38_47, %c298] : memref<64x320xf32, #tpu.memory_space<vmem>>, vector<2x22xf32>
    tpu.vector_store %arg7[%c38_47, %c298], %79 {strides = array<i32>} : memref<64x320xf32, #tpu.memory_space<vmem>>, vector<2x22xf32>,
    %81 = vector.extract_strided_slice %1 {offsets = [0, 38], sizes = [2, 282], strides = [1, 1]} : vector<2x320xf32> to vector<2x282xf32>
    %c40_48 = arith.constant 40 : index
    %c0_49 = arith.constant 0 : index
    %82 = vector.load %arg7[%c40_48, %c0_49] : memref<64x320xf32, #tpu.memory_space<vmem>>, vector<2x282xf32>
    tpu.vector_store %arg7[%c40_48, %c0_49], %81 {strides = array<i32>} : memref<64x320xf32, #tpu.memory_space<vmem>>, vector<2x282xf32>,
    %83 = vector.extract_strided_slice %1 {offsets = [0, 0], sizes = [2, 38], strides = [1, 1]} : vector<2x320xf32> to vector<2x38xf32>
    %c40_50 = arith.constant 40 : index
    %c282 = arith.constant 282 : index
    %84 = vector.load %arg7[%c40_50, %c282] : memref<64x320xf32, #tpu.memory_space<vmem>>, vector<2x38xf32>
    tpu.vector_store %arg7[%c40_50, %c282], %83 {strides = array<i32>} : memref<64x320xf32, #tpu.memory_space<vmem>>, vector<2x38xf32>,
    %85 = vector.extract_strided_slice %1 {offsets = [0, 39], sizes = [2, 281], strides = [1, 1]} : vector<2x320xf32> to vector<2x281xf32>
    %c42_51 = arith.constant 42 : index
    %c0_52 = arith.constant 0 : index
    %86 = vector.load %arg7[%c42_51, %c0_52] : memref<64x320xf32, #tpu.memory_space<vmem>>, vector<2x281xf32>
    tpu.vector_store %arg7[%c42_51, %c0_52], %85 {strides = array<i32>} : memref<64x320xf32, #tpu.memory_space<vmem>>, vector<2x281xf32>,
    %87 = vector.extract_strided_slice %1 {offsets = [0, 0], sizes = [2, 39], strides = [1, 1]} : vector<2x320xf32> to vector<2x39xf32>
    %c42_53 = arith.constant 42 : index
    %c281 = arith.constant 281 : index
    %88 = vector.load %arg7[%c42_53, %c281] : memref<64x320xf32, #tpu.memory_space<vmem>>, vector<2x39xf32>
    tpu.vector_store %arg7[%c42_53, %c281], %87 {strides = array<i32>} : memref<64x320xf32, #tpu.memory_space<vmem>>, vector<2x39xf32>,
    %89 = vector.extract_strided_slice %1 {offsets = [0, 40], sizes = [2, 280], strides = [1, 1]} : vector<2x320xf32> to vector<2x280xf32>
    %c44 = arith.constant 44 : index
    %c0_54 = arith.constant 0 : index
    %90 = vector.load %arg7[%c44, %c0_54] : memref<64x320xf32, #tpu.memory_space<vmem>>, vector<2x280xf32>
    tpu.vector_store %arg7[%c44, %c0_54], %89 {strides = array<i32>} : memref<64x320xf32, #tpu.memory_space<vmem>>, vector<2x280xf32>,
    %91 = vector.extract_strided_slice %1 {offsets = [0, 0], sizes = [2, 40], strides = [1, 1]} : vector<2x320xf32> to vector<2x40xf32>
    %c44_55 = arith.constant 44 : index
    %c280 = arith.constant 280 : index
    %92 = vector.load %arg7[%c44_55, %c280] : memref<64x320xf32, #tpu.memory_space<vmem>>, vector<2x40xf32>
    tpu.vector_store %arg7[%c44_55, %c280], %91 {strides = array<i32>} : memref<64x320xf32, #tpu.memory_space<vmem>>, vector<2x40xf32>,
    %93 = vector.extract_strided_slice %1 {offsets = [0, 41], sizes = [2, 279], strides = [1, 1]} : vector<2x320xf32> to vector<2x279xf32>
    %c46 = arith.constant 46 : index
    %c0_56 = arith.constant 0 : index
    %94 = vector.load %arg7[%c46, %c0_56] : memref<64x320xf32, #tpu.memory_space<vmem>>, vector<2x279xf32>
    tpu.vector_store %arg7[%c46, %c0_56], %93 {strides = array<i32>} : memref<64x320xf32, #tpu.memory_space<vmem>>, vector<2x279xf32>,
    %95 = vector.extract_strided_slice %1 {offsets = [0, 0], sizes = [2, 41], strides = [1, 1]} : vector<2x320xf32> to vector<2x41xf32>
    %c46_57 = arith.constant 46 : index
    %c279 = arith.constant 279 : index
    %96 = vector.load %arg7[%c46_57, %c279] : memref<64x320xf32, #tpu.memory_space<vmem>>, vector<2x41xf32>
    tpu.vector_store %arg7[%c46_57, %c279], %95 {strides = array<i32>} : memref<64x320xf32, #tpu.memory_space<vmem>>, vector<2x41xf32>,
    %97 = vector.extract_strided_slice %1 {offsets = [0, 42], sizes = [2, 278], strides = [1, 1]} : vector<2x320xf32> to vector<2x278xf32>
    %c48 = arith.constant 48 : index
    %c0_58 = arith.constant 0 : index
    %98 = vector.load %arg7[%c48, %c0_58] : memref<64x320xf32, #tpu.memory_space<vmem>>, vector<2x278xf32>
    tpu.vector_store %arg7[%c48, %c0_58], %97 {strides = array<i32>} : memref<64x320xf32, #tpu.memory_space<vmem>>, vector<2x278xf32>,
    %99 = vector.extract_strided_slice %1 {offsets = [0, 0], sizes = [2, 42], strides = [1, 1]} : vector<2x320xf32> to vector<2x42xf32>
    %c48_59 = arith.constant 48 : index
    %c278 = arith.constant 278 : index
    %100 = vector.load %arg7[%c48_59, %c278] : memref<64x320xf32, #tpu.memory_space<vmem>>, vector<2x42xf32>
    tpu.vector_store %arg7[%c48_59, %c278], %99 {strides = array<i32>} : memref<64x320xf32, #tpu.memory_space<vmem>>, vector<2x42xf32>,
    %c0_60 = arith.constant 0 : index
    %c0_61 = arith.constant 0 : index
    %101 = vector.load %arg7[%c0_60, %c0_61] : memref<64x320xf32, #tpu.memory_space<vmem>>, vector<64x320xf32>
    %c0_62 = arith.constant 0 : index
    %c0_63 = arith.constant 0 : index
    %102 = vector.load %arg2[%c0_62, %c0_63] : memref<98x64xf32, #tpu.memory_space<vmem>>, vector<98x64xf32>
    %cst_64 = arith.constant dense<0.000000e+00> : vector<98x320xf32>
    %103 = tpu.matmul %102, %101, %cst_64 {dimension_numbers = #tpu.dot_dimension_numbers<[1], [0], [0], [1], [0, 0, 1, 1], [], []>} : vector<98x64xf32>, vector<64x320xf32>, vector<98x320xf32> -> vector<98x320xf32>
    %c0_65 = arith.constant 0 : index
    %c0_66 = arith.constant 0 : index
    %104 = vector.load %arg3[%c0_65, %c0_66] : memref<98x1xf32, #tpu.memory_space<vmem>>, vector<98x1xf32>
    %105 = vector.broadcast %104 : vector<98x1xf32> to vector<98x320xf32>
    %106 = arith.addf %103, %105 : vector<98x320xf32>
    %107 = vector.extract_strided_slice %106 {offsets = [0, 0], sizes = [32, 320], strides = [1, 1]} : vector<98x320xf32> to vector<32x320xf32>
    %108 = vector.extract_strided_slice %106 {offsets = [32, 0], sizes = [32, 320], strides = [1, 1]} : vector<98x320xf32> to vector<32x320xf32>
    %109 = arith.mulf %107, %108 : vector<32x320xf32>
    %110 = vector.extract_strided_slice %106 {offsets = [64, 0], sizes = [32, 320], strides = [1, 1]} : vector<98x320xf32> to vector<32x320xf32>
    %111 = arith.mulf %109, %110 : vector<32x320xf32>
    %c0_67 = arith.constant 0 : index
    %c0_68 = arith.constant 0 : index
    %112 = vector.load %arg4[%c0_67, %c0_68] : memref<2x32xf32, #tpu.memory_space<vmem>>, vector<2x32xf32>
    %cst_69 = arith.constant dense<0.000000e+00> : vector<2x320xf32>
    %113 = tpu.matmul %112, %111, %cst_69 {dimension_numbers = #tpu.dot_dimension_numbers<[1], [0], [0], [1], [0, 0, 1, 1], [], []>} : vector<2x32xf32>, vector<32x320xf32>, vector<2x320xf32> -> vector<2x320xf32>
    %c0_70 = arith.constant 0 : index
    %c0_71 = arith.constant 0 : index
    %114 = vector.load %arg5[%c0_70, %c0_71] : memref<2x1xf32, #tpu.memory_space<vmem>>, vector<2x1xf32>
    %115 = vector.broadcast %114 : vector<2x1xf32> to vector<2x320xf32>
    %116 = arith.addf %113, %115 : vector<2x320xf32>
    %117 = vector.extract_strided_slice %106 {offsets = [96, 0], sizes = [2, 320], strides = [1, 1]} : vector<98x320xf32> to vector<2x320xf32>
    %118 = arith.addf %117, %116 : vector<2x320xf32>
    %cst_72 = arith.constant 2.500000e-04 : f32
    %119 = vector.broadcast %cst_72 : f32 to vector<2x320xf32>
    %120 = arith.mulf %118, %119 : vector<2x320xf32>
    %121 = arith.addf %1, %120 : vector<2x320xf32>
    %c0_73 = arith.constant 0 : index
    %c0_74 = arith.constant 0 : index
    %c0_75 = arith.constant 0 : index
    %122 = vector.load %arg6[%c0_73, %c0_74, %c0_75] : memref<1x2x320xf32, #tpu.memory_space<vmem>>, vector<1x2x320xf32>
    %123 = vector.shape_cast %122 : vector<1x2x320xf32> to vector<2x320xf32>
    %124 = vector.shape_cast %121 : vector<2x320xf32> to vector<1x2x320xf32>
    tpu.vector_store %arg6[%c0_73, %c0_74, %c0_75], %124 {strides = array<i32>} : memref<1x2x320xf32, #tpu.memory_space<vmem>>, vector<1x2x320xf32>,
    return
  }
  func.func @transform_0(%arg0: i32) -> (i32, i32, i32) {
    %c0_i32 = arith.constant 0 : i32
    %c0_i32_0 = arith.constant 0 : i32
    %c0_i32_1 = arith.constant 0 : i32
    return %arg0, %c0_i32, %c0_i32_0 : i32, i32, i32
  }
  func.func @transform_1(%arg0: i32) -> (i32, i32) {
    %c0_i32 = arith.constant 0 : i32
    %c0_i32_0 = arith.constant 0 : i32
    %c0_i32_1 = arith.constant 0 : i32
    return %c0_i32, %c0_i32_0 : i32, i32
  }
  func.func @transform_2(%arg0: i32) -> (i32, i32) {
    %c0_i32 = arith.constant 0 : i32
    %c0_i32_0 = arith.constant 0 : i32
    %c0_i32_1 = arith.constant 0 : i32
    return %c0_i32, %c0_i32_0 : i32, i32
  }
  func.func @transform_3(%arg0: i32) -> (i32, i32) {
    %c0_i32 = arith.constant 0 : i32
    %c0_i32_0 = arith.constant 0 : i32
    %c0_i32_1 = arith.constant 0 : i32
    return %c0_i32, %c0_i32_0 : i32, i32
  }
  func.func @transform_4(%arg0: i32) -> (i32, i32) {
    %c0_i32 = arith.constant 0 : i32
    %c0_i32_0 = arith.constant 0 : i32
    %c0_i32_1 = arith.constant 0 : i32
    return %c0_i32, %c0_i32_0 : i32, i32
  }
  func.func @transform_5(%arg0: i32) -> (i32, i32, i32) {
    %c0_i32 = arith.constant 0 : i32
    %c0_i32_0 = arith.constant 0 : i32
    %c0_i32_1 = arith.constant 0 : i32
    return %arg0, %c0_i32, %c0_i32_0 : i32, i32, i32
  }
}

</mosaic_0001>

<llo_original>
// kernel: tpu_custom_call.1
$region0: #{tpu_custom_call.1}
  #allocation0 [shape = 'u32[]', space=smem, size = 0x4, offset = 0x4, fixed_abs, tag = 'smem constant byte address 0x4 - core index']
  #allocation1 [shape = 'u32[72,128]{1,0:T(1,128)}', space=vmem, size = 0x9000, scoped, tag = 'internal scratch']
  #allocation2 [shape = 'f32[64,320]{1,0:T(8,128)}', space=vmem, size = 0x18000, scoped, tag = 'scratch operand']
  %s0 = inlined_call_operand.vmem [shape: f32[2,2,320], index: 0, kind: input, shape index: {}]
  %s1 = inlined_call_operand.vmem [shape: f32[98,64], index: 1, kind: input, shape index: {}]
  %s2 = inlined_call_operand.vmem [shape: f32[98,1], index: 2, kind: input, shape index: {}]
  %s3 = inlined_call_operand.vmem [shape: f32[2,32], index: 3, kind: input, shape index: {}]
  %s4 = inlined_call_operand.vmem [shape: f32[2,1], index: 4, kind: input, shape index: {}]
  %s5 = inlined_call_operand.hbm [shape: f32[2,2,320], index: 5, kind: output, shape index: {}]
  %s6 = sld [smem:[#allocation0]]
  $region53: #{tpu_custom_call.1} parent=0
    _
  %s8 = ssub.s32 1, %s6
  %s9 = scalar_select 0, %s8, %s6
  $region1: #{tpu_custom_call.1} parent=0
    #allocation3 [shape = 'u8[6144]{0}', space=vmem, size = 0x1800, scoped, tag = 'output window, operand 0']
    #allocation4 [shape = 's32[2]{0}', space=sflag, size = 0x8, scoped, tag = 'scoped memory for tpu_custom_call.1']
    %10 = vsyncpa [#allocation4], 0
    %s11 = scalar_lea.sflag [#allocation4], 1
    %12 = vsyncpa %s11, 0
    loop: start=0, step=1, limit=4
    $region2: #{tpu_custom_call.1} parent=1 // loop_pre_header
      _
    $region3: #{tpu_custom_call.1} parent=1 // loop_header
      %s14 = sphi 0, %s18
      %p15 = scmp.ge.s32.totalorder %s14, 4
      %s24 = sphi 0, %s26
      %s27 = sphi 0, %s24
      %s28 = sphi 0, %s27
      %s44 = sphi 0, %s28
      %s48 = sphi 0, %s48
      %s50 = sphi 0, %s48
      %s51 = sphi 0, %s50
      %s65 = sphi 0, %s51
      %s69 = sphi 0, %s69
      %s71 = sphi 0, %s69
      %s72 = sphi 0, %s71
      %s86 = sphi 0, %s72
      %s90 = sphi 0, %s90
      %s92 = sphi 0, %s90
      %s93 = sphi 0, %s92
      %s107 = sphi 0, %s93
      %s111 = sphi 0, %s111
      %s113 = sphi 0, %s111
      %s114 = sphi 0, %s113
      %s128 = sphi 0, %s114
      %s134 = sphi 0, %s136
      %s137 = sphi 0, %s134
      %s138 = sphi 0, %s137
      %s154 = sphi 0, %s138
    $region4: #{tpu_custom_call.1} parent=1 // loop_header_branch
      %17 = sbr.rel (%p15) target = $region8
    $region5: #{tpu_custom_call.1} parent=1 // loop_body
      %s19 = ssub.s32 %s14, 1
      %s20 = ssub.s32 %s14, 2
      %s21 = sadd.s32 %s14, 1
      %s22 = ssub.s32 %s14, %s21
      %p23 = scmp.eq.s32.totalorder %s22, 0
      %s25 = sadd.s32 %s24, 1
      %s26 = scalar_select %p23, %s24, %s25
      %p29 = pneg %p23
      %p30 = scmp.eq.s32.totalorder %s14, 1
      %p31 = por %p29, %p30
      %p32 = scmp.ne.s32.totalorder %s24, %s27
      %p33 = scmp.eq.s32.totalorder %s14, 0
      %p34 = por %p32, %p33
      %p35 = scmp.ne.s32.totalorder %s24, %s27
      %p36 = scmp.eq.s32.totalorder %s19, 1
      %p37 = por %p35, %p36
      %p38 = scmp.ne.s32.totalorder %s27, %s28
      %p39 = scmp.eq.s32.totalorder %s19, 0
      %p40 = por %p38, %p39
      %p41 = scmp.ne.s32.totalorder %s27, %s28
      %p42 = scmp.eq.s32.totalorder %s20, 1
      %p43 = por %p41, %p42
      %p45 = scmp.ne.s32.totalorder %s28, %s44
      %p46 = scmp.eq.s32.totalorder %s20, 0
      %p47 = por %p45, %p46
      %s49 = sadd.s32 %s48, 1
      %p52 = scmp.eq.s32.totalorder %s14, 1
      %p53 = scmp.ne.s32.totalorder %s48, %s50
      %p54 = scmp.eq.s32.totalorder %s14, 0
      %p55 = por %p53, %p54
      %p56 = scmp.ne.s32.totalorder %s48, %s50
      %p57 = scmp.eq.s32.totalorder %s19, 1
      %p58 = por %p56, %p57
      %p59 = scmp.ne.s32.totalorder %s50, %s51
      %p60 = scmp.eq.s32.totalorder %s19, 0
      %p61 = por %p59, %p60
      %p62 = scmp.ne.s32.totalorder %s50, %s51
      %p63 = scmp.eq.s32.totalorder %s20, 1
      %p64 = por %p62, %p63
      %p66 = scmp.ne.s32.totalorder %s51, %s65
      %p67 = scmp.eq.s32.totalorder %s20, 0
      %p68 = por %p66, %p67
      %s70 = sadd.s32 %s69, 1
      %p73 = scmp.eq.s32.totalorder %s14, 1
      %p74 = scmp.ne.s32.totalorder %s69, %s71
      %p75 = scmp.eq.s32.totalorder %s14, 0
      %p76 = por %p74, %p75
      %p77 = scmp.ne.s32.totalorder %s69, %s71
      %p78 = scmp.eq.s32.totalorder %s19, 1
      %p79 = por %p77, %p78
      %p80 = scmp.ne.s32.totalorder %s71, %s72
      %p81 = scmp.eq.s32.totalorder %s19, 0
      %p82 = por %p80, %p81
      %p83 = scmp.ne.s32.totalorder %s71, %s72
      %p84 = scmp.eq.s32.totalorder %s20, 1
      %p85 = por %p83, %p84
      %p87 = scmp.ne.s32.totalorder %s72, %s86
      %p88 = scmp.eq.s32.totalorder %s20, 0
      %p89 = por %p87, %p88
      %s91 = sadd.s32 %s90, 1
      %p94 = scmp.eq.s32.totalorder %s14, 1
      %p95 = scmp.ne.s32.totalorder %s90, %s92
      %p96 = scmp.eq.s32.totalorder %s14, 0
      %p97 = por %p95, %p96
      %p98 = scmp.ne.s32.totalorder %s90, %s92
      %p99 = scmp.eq.s32.totalorder %s19, 1
      %p100 = por %p98, %p99
      %p101 = scmp.ne.s32.totalorder %s92, %s93
      %p102 = scmp.eq.s32.totalorder %s19, 0
      %p103 = por %p101, %p102
      %p104 = scmp.ne.s32.totalorder %s92, %s93
      %p105 = scmp.eq.s32.totalorder %s20, 1
      %p106 = por %p104, %p105
      %p108 = scmp.ne.s32.totalorder %s93, %s107
      %p109 = scmp.eq.s32.totalorder %s20, 0
      %p110 = por %p108, %p109
      %s112 = sadd.s32 %s111, 1
      %p115 = scmp.eq.s32.totalorder %s14, 1
      %p116 = scmp.ne.s32.totalorder %s111, %s113
      %p117 = scmp.eq.s32.totalorder %s14, 0
      %p118 = por %p116, %p117
      %p119 = scmp.ne.s32.totalorder %s111, %s113
      %p120 = scmp.eq.s32.totalorder %s19, 1
      %p121 = por %p119, %p120
      %p122 = scmp.ne.s32.totalorder %s113, %s114
      %p123 = scmp.eq.s32.totalorder %s19, 0
      %p124 = por %p122, %p123
      %p125 = scmp.ne.s32.totalorder %s113, %s114
      %p126 = scmp.eq.s32.totalorder %s20, 1
      %p127 = por %p125, %p126
      %p129 = scmp.ne.s32.totalorder %s114, %s128
      %p130 = scmp.eq.s32.totalorder %s20, 0
      %p131 = por %p129, %p130
      %s132 = ssub.s32 %s14, %s21
      %p133 = scmp.eq.s32.totalorder %s132, 0
      %s135 = sadd.s32 %s134, 1
      %s136 = scalar_select %p133, %s134, %s135
      %p139 = pneg %p133
      %p140 = scmp.eq.s32.totalorder %s14, 1
      %p141 = por %p139, %p140
      %p142 = scmp.ne.s32.totalorder %s134, %s137
      %p143 = scmp.eq.s32.totalorder %s14, 0
      %p144 = por %p142, %p143
      %p145 = scmp.ne.s32.totalorder %s134, %s137
      %p146 = scmp.eq.s32.totalorder %s19, 1
      %p147 = por %p145, %p146
      %p148 = scmp.ne.s32.totalorder %s137, %s138
      %p149 = scmp.eq.s32.totalorder %s19, 0
      %p150 = por %p148, %p149
      %p151 = scmp.ne.s32.totalorder %s137, %s138
      %p152 = scmp.eq.s32.totalorder %s20, 1
      %p153 = por %p151, %p152
      %p155 = scmp.ne.s32.totalorder %s138, %s154
      %p156 = scmp.eq.s32.totalorder %s20, 0
      %p157 = por %p155, %p156
      %p158 = scmp.le.s32.totalorder 1, %s14
      %p159 = scmp.lt.s32.totalorder %s14, 3
      %p160 = pnand %p158, %p159
      %p161 = pneg %p160
      // Predicated region
      $region9: #{tpu_custom_call.1} parent=5 // pred_check
        _
      $region10: #{tpu_custom_call.1} parent=5 // pred_check_branch
        %163 = sbr.rel (%p160) target = $region12
      $region11: #{tpu_custom_call.1} parent=5 // pred_region
        %s164 = ssub.s32 %s14, 1
        // Predicated region
        $region13: #{tpu_custom_call.1} parent=11 // pred_check
          %p165 = pneg %p61
        $region14: #{tpu_custom_call.1} parent=11 // pred_check_branch
          %167 = sbr.rel (%p165) target = $region16
        $region15: #{tpu_custom_call.1} parent=11 // pred_region
          _
        $region16: #{tpu_custom_call.1} parent=11 // pred_fallthru
          _
        // Predicated region
        $region17: #{tpu_custom_call.1} parent=11 // pred_check
          %p168 = pneg %p82
        $region18: #{tpu_custom_call.1} parent=11 // pred_check_branch
          %170 = sbr.rel (%p168) target = $region20
        $region19: #{tpu_custom_call.1} parent=11 // pred_region
          _
        $region20: #{tpu_custom_call.1} parent=11 // pred_fallthru
          _
        // Predicated region
        $region21: #{tpu_custom_call.1} parent=11 // pred_check
          %p171 = pneg %p103
        $region22: #{tpu_custom_call.1} parent=11 // pred_check_branch
          %173 = sbr.rel (%p171) target = $region24
        $region23: #{tpu_custom_call.1} parent=11 // pred_region
          _
        $region24: #{tpu_custom_call.1} parent=11 // pred_fallthru
          _
        // Predicated region
        $region25: #{tpu_custom_call.1} parent=11 // pred_check
          %p174 = pneg %p124
        $region26: #{tpu_custom_call.1} parent=11 // pred_check_branch
          %176 = sbr.rel (%p174) target = $region28
        $region27: #{tpu_custom_call.1} parent=11 // pred_region
          _
        $region28: #{tpu_custom_call.1} parent=11 // pred_fallthru
          _
      $region12: #{tpu_custom_call.1} parent=5 // pred_fallthru
        _
      %p177 = scmp.lt.s32.totalorder %s14, 2
      // Predicated region
      $region29: #{tpu_custom_call.1} parent=5 // pred_check
        %p178 = pneg %p177
      $region30: #{tpu_custom_call.1} parent=5 // pred_check_branch
        %180 = sbr.rel (%p178) target = $region32
      $region31: #{tpu_custom_call.1} parent=5 // pred_region
        // Predicated region
        $region33: #{tpu_custom_call.1} parent=31 // pred_check
          %p181 = pneg %p34
        $region34: #{tpu_custom_call.1} parent=31 // pred_check_branch
          %183 = sbr.rel (%p181) target = $region36
        $region35: #{tpu_custom_call.1} parent=31 // pred_region
          %p184 = scmp.lt.s32.totalorder %s14, 1
          %s185 = scalar_select %p184, %s14, 1
          %s186 = smul.addr %s185, 3
          %s187 = smul.addr %s186, 2
          %s188 = scalar_lea.vmem %s0, %s187
        $region36: #{tpu_custom_call.1} parent=31 // pred_fallthru
          _
      $region32: #{tpu_custom_call.1} parent=5 // pred_fallthru
        _
      %p189 = scmp.le.s32.totalorder 1, %s14
      %p190 = scmp.lt.s32.totalorder %s14, 3
      %p191 = pnand %p189, %p190
      %p192 = pneg %p191
      // Predicated region
      $region37: #{tpu_custom_call.1} parent=5 // pred_check
        _
      $region38: #{tpu_custom_call.1} parent=5 // pred_check_branch
        %194 = sbr.rel (%p191) target = $region40
      $region39: #{tpu_custom_call.1} parent=5 // pred_region
        %s195 = ssub.s32 %s14, 1
        %p196 = scmp.lt.s32.totalorder %s19, 1
        %s197 = scalar_select %p196, %s19, 1
        %s198 = smul.addr %s197, 3
        %s199 = smul.addr %s198, 2
        %s200 = scalar_lea.vmem %s0, %s199
        %p201 = pneg %p40
        %p202 = pneg %p37
        %p203 = pneg %p61
        %p204 = pneg %p58
        %p205 = pneg %p82
        %p206 = pneg %p79
        %p207 = pneg %p103
        %p208 = pneg %p100
        %p209 = pneg %p124
        %p210 = pneg %p121
        %p211 = pneg %p150
        %p212 = pneg %p147
        %s213 = sand.u32 %s137, 1
        %s214 = scalar_lea.sflag [#allocation4], %s213
        %s215 = sand.u32 %s137, 1
        %s216 = smul.addr %s215, 6
        %s217 = scalar_lea.vmem [#allocation3], %s216
        %p218 = scmp.lt.s32.totalorder %s19, 1
        %s219 = scalar_select %p218, %s19, 1
        %s220 = smul.addr %s219, 3
        %s221 = smul.addr %s220, 2
        %s222 = scalar_lea.vmem %s0, %s221
        %v223 = vld [vmem:[%s222] sm:$0x3f]
        %224 = vst [vmem:[#allocation2 + $0x90] sm:$0xfc] 0.0
        %225 = vst [vmem:[#allocation2 + $0x98] sm:$0xfc] 0.0
        %vm226 = vcmask 523266
        %227 = vst.msk [vmem:[#allocation2 + $0xa0] sm:$0xfc] %vm226, 0.0
        %228 = vst [vmem:[#allocation2 + $0xa8] sm:$0xff] 0.0
        %229 = vst [vmem:[#allocation2 + $0xb0] sm:$0xff] 0.0
        %vm230 = vcmask 523264
        %231 = vst.msk [vmem:[#allocation2 + $0xb8] sm:$0xff] %vm230, 0.0
        %233 = vst [vmem:[#allocation1] ss:$4 sm:$0xff] %v223
        %v234 = vld.sshfl [vmem:[#allocation1 + $0x10] sm:$0xff pattern:$0x73625140]
        %235 = vrot.lane.b32.xlu0 %v234, 106
        %v236 = vpop.permute.xlu0 %235
        %vm238 = vcmask 336896
        %239 = vst.msk [vmem:[#allocation2] sm:$0x3] %vm238, %v236
        %240 = vst [vmem:[#allocation1] ss:$4 sm:$0xff] %v223
        %v241 = vld.sshfl [vmem:[#allocation1] sm:$0xff pattern:$0x73625140]
        %v242 = vld.sshfl [vmem:[#allocation1 + $0x8] sm:$0xff pattern:$0x73625140]
        %v243 = vld.sshfl [vmem:[#allocation1 + $0x10] sm:$0xff pattern:$0x73625140]
        %244 = vrot.lane.b32.xlu0 %v241, 42
        %v245 = vpop.permute.xlu0 %244
        %246 = vrot.lane.b32.xlu0 %v242, 42
        %v247 = vpop.permute.xlu0 %246
        %248 = vrot.lane.b32.xlu0 %v243, 42
        %v249 = vpop.permute.xlu0 %248
        %vm250 = vcmask 343040
        %v251 = vsel %vm250, %v245, %v247
        %v252 = vsel %vm250, %v247, %v249
        %vm256 = vcmask 1041744
        %257 = vst.msk [vmem:[#allocation2] sm:$0x3] %vm256, %v245
        %258 = vst [vmem:[#allocation2 + $0x8] sm:$0x3] %v251
        %vm259 = vcmask 517120
        %260 = vst.msk [vmem:[#allocation2 + $0x10] sm:$0x3] %vm259, %v252
        %s261 = scalar_lea.vmem [#allocation1], 1
        %262 = vst [vmem:[%s261] ss:$4 sm:$0xff] %v223
        %v263 = vld.sshfl [vmem:[#allocation1 + $0x10] sm:$0xff pattern:$0x73625140]
        %264 = vrot.lane.b32.xlu0 %v263, 105
        %v265 = vpop.permute.xlu0 %264
        %vm267 = vcmask 330754
        %268 = vst.msk [vmem:[#allocation2] sm:$0xc] %vm267, %v265
        %s269 = scalar_lea.vmem [#allocation1], 1
        %270 = vst [vmem:[%s269] ss:$4 sm:$0xff] %v223
        %v271 = vld.sshfl [vmem:[#allocation1] sm:$0xff pattern:$0x73625140]
        %v272 = vld.sshfl [vmem:[#allocation1 + $0x8] sm:$0xff pattern:$0x73625140]
        %v273 = vld.sshfl [vmem:[#allocation1 + $0x10] sm:$0xff pattern:$0x73625140]
        %274 = vrot.lane.b32.xlu0 %v271, 41
        %v275 = vpop.permute.xlu0 %274
        %276 = vrot.lane.b32.xlu0 %v272, 41
        %v277 = vpop.permute.xlu0 %276
        %278 = vrot.lane.b32.xlu0 %v273, 41
        %v279 = vpop.permute.xlu0 %278
        %vm280 = vcmask 334848
        %v281 = vsel %vm280, %v275, %v277
        %v282 = vsel %vm280, %v277, %v279
        %vm286 = vcmask 1043786
        %287 = vst.msk [vmem:[#allocation2] sm:$0xc] %vm286, %v275
        %288 = vst [vmem:[#allocation2 + $0x8] sm:$0xc] %v281
        %vm289 = vcmask 519170
        %290 = vst.msk [vmem:[#allocation2 + $0x10] sm:$0xc] %vm289, %v282
        %s291 = scalar_lea.vmem [#allocation1], 2
        %292 = vst [vmem:[%s291] ss:$4 sm:$0xff] %v223
        %v293 = vld.sshfl [vmem:[#allocation1 + $0x10] sm:$0xff pattern:$0x73625140]
        %294 = vrot.lane.b32.xlu0 %v293, 104
        %v295 = vpop.permute.xlu0 %294
        %vm297 = vcmask 324612
        %298 = vst.msk [vmem:[#allocation2] sm:$0x30] %vm297, %v295
        %s299 = scalar_lea.vmem [#allocation1], 2
        %300 = vst [vmem:[%s299] ss:$4 sm:$0xff] %v223
        %v301 = vld.sshfl [vmem:[#allocation1] sm:$0xff pattern:$0x73625140]
        %v302 = vld.sshfl [vmem:[#allocation1 + $0x8] sm:$0xff pattern:$0x73625140]
        %v303 = vld.sshfl [vmem:[#allocation1 + $0x10] sm:$0xff pattern:$0x73625140]
        %304 = vrot.lane.b32.xlu0 %v301, 40
        %v305 = vpop.permute.xlu0 %304
        %306 = vrot.lane.b32.xlu0 %v302, 40
        %v307 = vpop.permute.xlu0 %306
        %308 = vrot.lane.b32.xlu0 %v303, 40
        %v309 = vpop.permute.xlu0 %308
        %vm310 = vcmask 326656
        %v311 = vsel %vm310, %v305, %v307
        %v312 = vsel %vm310, %v307, %v309
        %vm316 = vcmask 1045828
        %317 = vst.msk [vmem:[#allocation2] sm:$0x30] %vm316, %v305
        %318 = vst [vmem:[#allocation2 + $0x8] sm:$0x30] %v311
        %vm319 = vcmask 521220
        %320 = vst.msk [vmem:[#allocation2 + $0x10] sm:$0x30] %vm319, %v312
        %s321 = scalar_lea.vmem [#allocation1], 3
        %322 = vst [vmem:[%s321] ss:$4 sm:$0xff] %v223
        %v323 = vld.sshfl [vmem:[#allocation1 + $0x10] sm:$0xff pattern:$0x73625140]
        %324 = vrot.lane.b32.xlu0 %v323, 103
        %v325 = vpop.permute.xlu0 %324
        %vm327 = vcmask 318470
        %328 = vst.msk [vmem:[#allocation2] sm:$0xc0] %vm327, %v325
        %s329 = scalar_lea.vmem [#allocation1], 3
        %330 = vst [vmem:[%s329] ss:$4 sm:$0xff] %v223
        %v331 = vld.sshfl [vmem:[#allocation1] sm:$0xff pattern:$0x73625140]
        %v332 = vld.sshfl [vmem:[#allocation1 + $0x8] sm:$0xff pattern:$0x73625140]
        %v333 = vld.sshfl [vmem:[#allocation1 + $0x10] sm:$0xff pattern:$0x73625140]
        %334 = vrot.lane.b32.xlu0 %v331, 39
        %v335 = vpop.permute.xlu0 %334
        %336 = vrot.lane.b32.xlu0 %v332, 39
        %v337 = vpop.permute.xlu0 %336
        %338 = vrot.lane.b32.xlu0 %v333, 39
        %v339 = vpop.permute.xlu0 %338
        %vm340 = vcmask 318464
        %v341 = vsel %vm340, %v335, %v337
        %v342 = vsel %vm340, %v337, %v339
        %vm346 = vcmask 1047870
        %347 = vst.msk [vmem:[#allocation2] sm:$0xc0] %vm346, %v335
        %348 = vst [vmem:[#allocation2 + $0x8] sm:$0xc0] %v341
        %vm349 = vcmask 523270
        %350 = vst.msk [vmem:[#allocation2 + $0x10] sm:$0xc0] %vm349, %v342
        %351 = vst [vmem:[#allocation1] ss:$4 sm:$0xff] %v223
        %v352 = vld.sshfl [vmem:[#allocation1 + $0x10] sm:$0xff pattern:$0x73625140]
        %353 = vrot.lane.b32.xlu0 %v352, 102
        %v354 = vpop.permute.xlu0 %353
        %vm356 = vcmask 304128
        %357 = vst.msk [vmem:[#allocation2 + $0x18] sm:$0x3] %vm356, %v354
        %358 = vst [vmem:[#allocation1] ss:$4 sm:$0xff] %v223
        %v359 = vld.sshfl [vmem:[#allocation1] sm:$0xff pattern:$0x73625140]
        %v360 = vld.sshfl [vmem:[#allocation1 + $0x8] sm:$0xff pattern:$0x73625140]
        %v361 = vld.sshfl [vmem:[#allocation1 + $0x10] sm:$0xff pattern:$0x73625140]
        %362 = vrot.lane.b32.xlu0 %v359, 38
        %v363 = vpop.permute.xlu0 %362
        %364 = vrot.lane.b32.xlu0 %v360, 38
        %v365 = vpop.permute.xlu0 %364
        %366 = vrot.lane.b32.xlu0 %v361, 38
        %v367 = vpop.permute.xlu0 %366
        %vm368 = vcmask 310272
        %v369 = vsel %vm368, %v363, %v365
        %v370 = vsel %vm368, %v365, %v367
        %vm374 = vcmask 1041712
        %375 = vst.msk [vmem:[#allocation2 + $0x18] sm:$0x3] %vm374, %v363
        %376 = vst [vmem:[#allocation2 + $0x20] sm:$0x3] %v369
        %377 = vst.msk [vmem:[#allocation2 + $0x28] sm:$0x3] %vm259, %v370
        %s378 = scalar_lea.vmem [#allocation1], 1
        %379 = vst [vmem:[%s378] ss:$4 sm:$0xff] %v223
        %v380 = vld.sshfl [vmem:[#allocation1 + $0x10] sm:$0xff pattern:$0x73625140]
        %381 = vrot.lane.b32.xlu0 %v380, 86
        %v382 = vpop.permute.xlu0 %381
        %vm384 = vcmask 175106
        %385 = vst.msk [vmem:[#allocation2 + $0x18] sm:$0xc] %vm384, %v382
        %s386 = scalar_lea.vmem [#allocation1], 1
        %387 = vst [vmem:[%s386] ss:$4 sm:$0xff] %v223
        %v388 = vld.sshfl [vmem:[#allocation1] sm:$0xff pattern:$0x73625140]
        %v389 = vld.sshfl [vmem:[#allocation1 + $0x8] sm:$0xff pattern:$0x73625140]
        %v390 = vld.sshfl [vmem:[#allocation1 + $0x10] sm:$0xff pattern:$0x73625140]
        %391 = vrot.lane.b32.xlu0 %v388, 22
        %v392 = vpop.permute.xlu0 %391
        %393 = vrot.lane.b32.xlu0 %v389, 22
        %v394 = vpop.permute.xlu0 %393
        %395 = vrot.lane.b32.xlu0 %v390, 22
        %v396 = vpop.permute.xlu0 %395
        %vm397 = vcmask 179200
        %v398 = vsel %vm397, %v392, %v394
        %v399 = vsel %vm397, %v394, %v396
        %vm403 = vcmask 1043634
        %404 = vst.msk [vmem:[#allocation2 + $0x18] sm:$0xc] %vm403, %v392
        %405 = vst [vmem:[#allocation2 + $0x20] sm:$0xc] %v398
        %406 = vst.msk [vmem:[#allocation2 + $0x28] sm:$0xc] %vm289, %v399
        %s407 = scalar_lea.vmem [#allocation1], 2
        %408 = vst [vmem:[%s407] ss:$4 sm:$0xff] %v223
        %v409 = vld.sshfl [vmem:[#allocation1 + $0x10] sm:$0xff pattern:$0x73625140]
        %410 = vrot.lane.b32.xlu0 %v409, 85
        %v411 = vpop.permute.xlu0 %410
        %vm413 = vcmask 168964
        %414 = vst.msk [vmem:[#allocation2 + $0x18] sm:$0x30] %vm413, %v411
        %s415 = scalar_lea.vmem [#allocation1], 2
        %416 = vst [vmem:[%s415] ss:$4 sm:$0xff] %v223
        %v417 = vld.sshfl [vmem:[#allocation1] sm:$0xff pattern:$0x73625140]
        %v418 = vld.sshfl [vmem:[#allocation1 + $0x8] sm:$0xff pattern:$0x73625140]
        %v419 = vld.sshfl [vmem:[#allocation1 + $0x10] sm:$0xff pattern:$0x73625140]
        %420 = vrot.lane.b32.xlu0 %v417, 21
        %v421 = vpop.permute.xlu0 %420
        %422 = vrot.lane.b32.xlu0 %v418, 21
        %v423 = vpop.permute.xlu0 %422
        %424 = vrot.lane.b32.xlu0 %v419, 21
        %v425 = vpop.permute.xlu0 %424
        %vm426 = vcmask 171008
        %v427 = vsel %vm426, %v421, %v423
        %v428 = vsel %vm426, %v423, %v425
        %vm432 = vcmask 1045676
        %433 = vst.msk [vmem:[#allocation2 + $0x18] sm:$0x30] %vm432, %v421
        %434 = vst [vmem:[#allocation2 + $0x20] sm:$0x30] %v427
        %435 = vst.msk [vmem:[#allocation2 + $0x28] sm:$0x30] %vm319, %v428
        %s436 = scalar_lea.vmem [#allocation1], 3
        %437 = vst [vmem:[%s436] ss:$4 sm:$0xff] %v223
        %v438 = vld.sshfl [vmem:[#allocation1 + $0x10] sm:$0xff pattern:$0x73625140]
        %439 = vrot.lane.b32.xlu0 %v438, 84
        %v440 = vpop.permute.xlu0 %439
        %vm442 = vcmask 162822
        %443 = vst.msk [vmem:[#allocation2 + $0x18] sm:$0xc0] %vm442, %v440
        %s444 = scalar_lea.vmem [#allocation1], 3
        %445 = vst [vmem:[%s444] ss:$4 sm:$0xff] %v223
        %v446 = vld.sshfl [vmem:[#allocation1] sm:$0xff pattern:$0x73625140]
        %v447 = vld.sshfl [vmem:[#allocation1 + $0x8] sm:$0xff pattern:$0x73625140]
        %v448 = vld.sshfl [vmem:[#allocation1 + $0x10] sm:$0xff pattern:$0x73625140]
        %449 = vrot.lane.b32.xlu0 %v446, 20
        %v450 = vpop.permute.xlu0 %449
        %451 = vrot.lane.b32.xlu0 %v447, 20
        %v452 = vpop.permute.xlu0 %451
        %453 = vrot.lane.b32.xlu0 %v448, 20
        %v454 = vpop.permute.xlu0 %453
        %vm455 = vcmask 162816
        %v456 = vsel %vm455, %v450, %v452
        %v457 = vsel %vm455, %v452, %v454
        %vm461 = vcmask 1047718
        %462 = vst.msk [vmem:[#allocation2 + $0x18] sm:$0xc0] %vm461, %v450
        %463 = vst [vmem:[#allocation2 + $0x20] sm:$0xc0] %v456
        %464 = vst.msk [vmem:[#allocation2 + $0x28] sm:$0xc0] %vm349, %v457
        %465 = vst [vmem:[#allocation1] ss:$4 sm:$0xff] %v223
        %v466 = vld.sshfl [vmem:[#allocation1 + $0x10] sm:$0xff pattern:$0x73625140]
        %467 = vrot.lane.b32.xlu0 %v466, 83
        %v468 = vpop.permute.xlu0 %467
        %vm470 = vcmask 148480
        %471 = vst.msk [vmem:[#allocation2 + $0x30] sm:$0x3] %vm470, %v468
        %472 = vst [vmem:[#allocation1] ss:$4 sm:$0xff] %v223
        %v473 = vld.sshfl [vmem:[#allocation1] sm:$0xff pattern:$0x73625140]
        %v474 = vld.sshfl [vmem:[#allocation1 + $0x8] sm:$0xff pattern:$0x73625140]
        %v475 = vld.sshfl [vmem:[#allocation1 + $0x10] sm:$0xff pattern:$0x73625140]
        %476 = vrot.lane.b32.xlu0 %v473, 19
        %v477 = vpop.permute.xlu0 %476
        %478 = vrot.lane.b32.xlu0 %v474, 19
        %v479 = vpop.permute.xlu0 %478
        %480 = vrot.lane.b32.xlu0 %v475, 19
        %v481 = vpop.permute.xlu0 %480
        %vm482 = vcmask 154624
        %v483 = vsel %vm482, %v477, %v479
        %v484 = vsel %vm482, %v479, %v481
        %vm488 = vcmask 1041560
        %489 = vst.msk [vmem:[#allocation2 + $0x30] sm:$0x3] %vm488, %v477
        %490 = vst [vmem:[#allocation2 + $0x38] sm:$0x3] %v483
        %491 = vst.msk [vmem:[#allocation2 + $0x40] sm:$0x3] %vm259, %v484
        %s492 = scalar_lea.vmem [#allocation1], 1
        %493 = vst [vmem:[%s492] ss:$4 sm:$0xff] %v223
        %v494 = vld.sshfl [vmem:[#allocation1 + $0x10] sm:$0xff pattern:$0x73625140]
        %495 = vrot.lane.b32.xlu0 %v494, 82
        %v496 = vpop.permute.xlu0 %495
        %vm498 = vcmask 142338
        %499 = vst.msk [vmem:[#allocation2 + $0x30] sm:$0xc] %vm498, %v496
        %s500 = scalar_lea.vmem [#allocation1], 1
        %501 = vst [vmem:[%s500] ss:$4 sm:$0xff] %v223
        %v502 = vld.sshfl [vmem:[#allocation1] sm:$0xff pattern:$0x73625140]
        %v503 = vld.sshfl [vmem:[#allocation1 + $0x8] sm:$0xff pattern:$0x73625140]
        %v504 = vld.sshfl [vmem:[#allocation1 + $0x10] sm:$0xff pattern:$0x73625140]
        %505 = vrot.lane.b32.xlu0 %v502, 18
        %v506 = vpop.permute.xlu0 %505
        %507 = vrot.lane.b32.xlu0 %v503, 18
        %v508 = vpop.permute.xlu0 %507
        %509 = vrot.lane.b32.xlu0 %v504, 18
        %v510 = vpop.permute.xlu0 %509
        %vm511 = vcmask 146432
        %v512 = vsel %vm511, %v506, %v508
        %v513 = vsel %vm511, %v508, %v510
        %vm517 = vcmask 1043602
        %518 = vst.msk [vmem:[#allocation2 + $0x30] sm:$0xc] %vm517, %v506
        %519 = vst [vmem:[#allocation2 + $0x38] sm:$0xc] %v512
        %520 = vst.msk [vmem:[#allocation2 + $0x40] sm:$0xc] %vm289, %v513
        %s521 = scalar_lea.vmem [#allocation1], 2
        %522 = vst [vmem:[%s521] ss:$4 sm:$0xff] %v223
        %v523 = vld.sshfl [vmem:[#allocation1 + $0x10] sm:$0xff pattern:$0x73625140]
        %524 = vrot.lane.b32.xlu0 %v523, 66
        %v525 = vpop.permute.xlu0 %524
        %vm527 = vcmask 13316
        %528 = vst.msk [vmem:[#allocation2 + $0x30] sm:$0x30] %vm527, %v525
        %s529 = scalar_lea.vmem [#allocation1], 2
        %530 = vst [vmem:[%s529] ss:$4 sm:$0xff] %v223
        %v531 = vld.sshfl [vmem:[#allocation1] sm:$0xff pattern:$0x73625140]
        %v532 = vld.sshfl [vmem:[#allocation1 + $0x8] sm:$0xff pattern:$0x73625140]
        %v533 = vld.sshfl [vmem:[#allocation1 + $0x10] sm:$0xff pattern:$0x73625140]
        %534 = vrot.lane.b32.xlu0 %v531, 2
        %v535 = vpop.permute.xlu0 %534
        %536 = vrot.lane.b32.xlu0 %v532, 2
        %v537 = vpop.permute.xlu0 %536
        %538 = vrot.lane.b32.xlu0 %v533, 2
        %v539 = vpop.permute.xlu0 %538
        %vm540 = vcmask 15360
        %v541 = vsel %vm540, %v535, %v537
        %v542 = vsel %vm540, %v537, %v539
        %vm546 = vcmask 1045524
        %547 = vst.msk [vmem:[#allocation2 + $0x30] sm:$0x30] %vm546, %v535
        %548 = vst [vmem:[#allocation2 + $0x38] sm:$0x30] %v541
        %549 = vst.msk [vmem:[#allocation2 + $0x40] sm:$0x30] %vm319, %v542
        %s550 = scalar_lea.vmem [#allocation1], 3
        %551 = vst [vmem:[%s550] ss:$4 sm:$0xff] %v223
        %v552 = vld.sshfl [vmem:[#allocation1 + $0x10] sm:$0xff pattern:$0x73625140]
        %553 = vrot.lane.b32.xlu0 %v552, 65
        %v554 = vpop.permute.xlu0 %553
        %vm556 = vcmask 7174
        %557 = vst.msk [vmem:[#allocation2 + $0x30] sm:$0xc0] %vm556, %v554
        %s558 = scalar_lea.vmem [#allocation1], 3
        %559 = vst [vmem:[%s558] ss:$4 sm:$0xff] %v223
        %v560 = vld.sshfl [vmem:[#allocation1] sm:$0xff pattern:$0x73625140]
        %v561 = vld.sshfl [vmem:[#allocation1 + $0x8] sm:$0xff pattern:$0x73625140]
        %v562 = vld.sshfl [vmem:[#allocation1 + $0x10] sm:$0xff pattern:$0x73625140]
        %563 = vrot.lane.b32.xlu0 %v560, 1
        %v564 = vpop.permute.xlu0 %563
        %565 = vrot.lane.b32.xlu0 %v561, 1
        %v566 = vpop.permute.xlu0 %565
        %567 = vrot.lane.b32.xlu0 %v562, 1
        %v568 = vpop.permute.xlu0 %567
        %vm569 = vcmask 7168
        %v570 = vsel %vm569, %v564, %v566
        %v571 = vsel %vm569, %v566, %v568
        %vm575 = vcmask 1047566
        %576 = vst.msk [vmem:[#allocation2 + $0x30] sm:$0xc0] %vm575, %v564
        %577 = vst [vmem:[#allocation2 + $0x38] sm:$0xc0] %v570
        %578 = vst.msk [vmem:[#allocation2 + $0x40] sm:$0xc0] %vm349, %v571
        %579 = vst [vmem:[#allocation1] ss:$4 sm:$0xff] %v223
        %v580 = vld.sshfl [vmem:[#allocation1] sm:$0xff pattern:$0x73625140]
        %v581 = vld.sshfl [vmem:[#allocation1 + $0x8] sm:$0xff pattern:$0x73625140]
        %v582 = vld.sshfl [vmem:[#allocation1 + $0x10] sm:$0xff pattern:$0x73625140]
        %586 = vst [vmem:[#allocation2 + $0x48] sm:$0x3] %v580
        %587 = vst [vmem:[#allocation2 + $0x50] sm:$0x3] %v581
        %588 = vst.msk [vmem:[#allocation2 + $0x58] sm:$0x3] %vm259, %v582
        %s589 = scalar_lea.vmem [#allocation1], 1
        %590 = vst [vmem:[%s589] ss:$4 sm:$0xff] %v223
        %v591 = vld.sshfl [vmem:[#allocation1] sm:$0xff pattern:$0x73625140]
        %v592 = vld.sshfl [vmem:[#allocation1 + $0x8] sm:$0xff pattern:$0x73625140]
        %v593 = vld.sshfl [vmem:[#allocation1 + $0x10] sm:$0xff pattern:$0x73625140]
        %594 = vrot.lane.b32.xlu0 %v591, 127
        %v595 = vpop.permute.xlu0 %594
        %596 = vrot.lane.b32.xlu0 %v592, 127
        %v597 = vpop.permute.xlu0 %596
        %598 = vrot.lane.b32.xlu0 %v593, 127
        %v599 = vpop.permute.xlu0 %598
        %vm600 = vcmask 1039360
        %v601 = vsel %vm600, %v595, %v597
        %v602 = vsel %vm600, %v597, %v599
        %606 = vst [vmem:[#allocation2 + $0x48] sm:$0xc] %v601
        %607 = vst [vmem:[#allocation2 + $0x50] sm:$0xc] %v602
        %vm608 = vcmask 510978
        %609 = vst.msk [vmem:[#allocation2 + $0x58] sm:$0xc] %vm608, %v599
        %s610 = scalar_lea.vmem [#allocation1], 1
        %611 = vst [vmem:[%s610] ss:$4 sm:$0xff] %v223
        %v612 = vld.sshfl [vmem:[#allocation1] sm:$0xff pattern:$0x73625140]
        %613 = vrot.lane.b32.xlu0 %v612, 63
        %v614 = vpop.permute.xlu0 %613
        %vm616 = vcmask 519674
        %617 = vst.msk [vmem:[#allocation2 + $0x58] sm:$0xc] %vm616, %v614
        %s618 = scalar_lea.vmem [#allocation1], 2
        %619 = vst [vmem:[%s618] ss:$4 sm:$0xff] %v223
        %v620 = vld.sshfl [vmem:[#allocation1] sm:$0xff pattern:$0x73625140]
        %v621 = vld.sshfl [vmem:[#allocation1 + $0x8] sm:$0xff pattern:$0x73625140]
        %v622 = vld.sshfl [vmem:[#allocation1 + $0x10] sm:$0xff pattern:$0x73625140]
        %623 = vrot.lane.b32.xlu0 %v620, 126
        %v624 = vpop.permute.xlu0 %623
        %625 = vrot.lane.b32.xlu0 %v621, 126
        %v626 = vpop.permute.xlu0 %625
        %627 = vrot.lane.b32.xlu0 %v622, 126
        %v628 = vpop.permute.xlu0 %627
        %vm629 = vcmask 1031168
        %v630 = vsel %vm629, %v624, %v626
        %v631 = vsel %vm629, %v626, %v628
        %635 = vst [vmem:[#allocation2 + $0x48] sm:$0x30] %v630
        %636 = vst [vmem:[#allocation2 + $0x50] sm:$0x30] %v631
        %vm637 = vcmask 504836
        %638 = vst.msk [vmem:[#allocation2 + $0x58] sm:$0x30] %vm637, %v628
        %s639 = scalar_lea.vmem [#allocation1], 2
        %640 = vst [vmem:[%s639] ss:$4 sm:$0xff] %v223
        %v641 = vld.sshfl [vmem:[#allocation1] sm:$0xff pattern:$0x73625140]
        %642 = vrot.lane.b32.xlu0 %v641, 62
        %v643 = vpop.permute.xlu0 %642
        %vm645 = vcmask 521716
        %646 = vst.msk [vmem:[#allocation2 + $0x58] sm:$0x30] %vm645, %v643
        %s647 = scalar_lea.vmem [#allocation1], 3
        %648 = vst [vmem:[%s647] ss:$4 sm:$0xff] %v223
        %v649 = vld.sshfl [vmem:[#allocation1] sm:$0xff pattern:$0x73625140]
        %v650 = vld.sshfl [vmem:[#allocation1 + $0x8] sm:$0xff pattern:$0x73625140]
        %v651 = vld.sshfl [vmem:[#allocation1 + $0x10] sm:$0xff pattern:$0x73625140]
        %652 = vrot.lane.b32.xlu0 %v649, 110
        %v653 = vpop.permute.xlu0 %652
        %654 = vrot.lane.b32.xlu0 %v650, 110
        %v655 = vpop.permute.xlu0 %654
        %656 = vrot.lane.b32.xlu0 %v651, 110
        %v657 = vpop.permute.xlu0 %656
        %vm658 = vcmask 900096
        %v659 = vsel %vm658, %v653, %v655
        %v660 = vsel %vm658, %v655, %v657
        %664 = vst [vmem:[#allocation2 + $0x48] sm:$0xc0] %v659
        %665 = vst [vmem:[#allocation2 + $0x50] sm:$0xc0] %v660
        %vm666 = vcmask 375814
        %667 = vst.msk [vmem:[#allocation2 + $0x58] sm:$0xc0] %vm666, %v657
        %s668 = scalar_lea.vmem [#allocation1], 3
        %669 = vst [vmem:[%s668] ss:$4 sm:$0xff] %v223
        %v670 = vld.sshfl [vmem:[#allocation1] sm:$0xff pattern:$0x73625140]
        %671 = vrot.lane.b32.xlu0 %v670, 46
        %v672 = vpop.permute.xlu0 %671
        %vm674 = vcmask 523638
        %675 = vst.msk [vmem:[#allocation2 + $0x58] sm:$0xc0] %vm674, %v672
        %676 = vst [vmem:[#allocation1] ss:$4 sm:$0xff] %v223
        %v677 = vld.sshfl [vmem:[#allocation1] sm:$0xff pattern:$0x73625140]
        %v678 = vld.sshfl [vmem:[#allocation1 + $0x8] sm:$0xff pattern:$0x73625140]
        %v679 = vld.sshfl [vmem:[#allocation1 + $0x10] sm:$0xff pattern:$0x73625140]
        %680 = vrot.lane.b32.xlu0 %v677, 109
        %v681 = vpop.permute.xlu0 %680
        %682 = vrot.lane.b32.xlu0 %v678, 109
        %v683 = vpop.permute.xlu0 %682
        %684 = vrot.lane.b32.xlu0 %v679, 109
        %v685 = vpop.permute.xlu0 %684
        %vm686 = vcmask 891904
        %v687 = vsel %vm686, %v681, %v683
        %v688 = vsel %vm686, %v683, %v685
        %692 = vst [vmem:[#allocation2 + $0x60] sm:$0x3] %v687
        %693 = vst [vmem:[#allocation2 + $0x68] sm:$0x3] %v688
        %vm694 = vcmask 361472
        %695 = vst.msk [vmem:[#allocation2 + $0x70] sm:$0x3] %vm694, %v685
        %696 = vst [vmem:[#allocation1] ss:$4 sm:$0xff] %v223
        %v697 = vld.sshfl [vmem:[#allocation1] sm:$0xff pattern:$0x73625140]
        %698 = vrot.lane.b32.xlu0 %v697, 45
        %v699 = vpop.permute.xlu0 %698
        %vm701 = vcmask 517480
        %702 = vst.msk [vmem:[#allocation2 + $0x70] sm:$0x3] %vm701, %v699
        %s703 = scalar_lea.vmem [#allocation1], 1
        %704 = vst [vmem:[%s703] ss:$4 sm:$0xff] %v223
        %v705 = vld.sshfl [vmem:[#allocation1] sm:$0xff pattern:$0x73625140]
        %v706 = vld.sshfl [vmem:[#allocation1 + $0x8] sm:$0xff pattern:$0x73625140]
        %v707 = vld.sshfl [vmem:[#allocation1 + $0x10] sm:$0xff pattern:$0x73625140]
        %708 = vrot.lane.b32.xlu0 %v705, 108
        %v709 = vpop.permute.xlu0 %708
        %710 = vrot.lane.b32.xlu0 %v706, 108
        %v711 = vpop.permute.xlu0 %710
        %712 = vrot.lane.b32.xlu0 %v707, 108
        %v713 = vpop.permute.xlu0 %712
        %vm714 = vcmask 883712
        %v715 = vsel %vm714, %v709, %v711
        %v716 = vsel %vm714, %v711, %v713
        %720 = vst [vmem:[#allocation2 + $0x60] sm:$0xc] %v715
        %721 = vst [vmem:[#allocation2 + $0x68] sm:$0xc] %v716
        %vm722 = vcmask 355330
        %723 = vst.msk [vmem:[#allocation2 + $0x70] sm:$0xc] %vm722, %v713
        %s724 = scalar_lea.vmem [#allocation1], 1
        %725 = vst [vmem:[%s724] ss:$4 sm:$0xff] %v223
        %v726 = vld.sshfl [vmem:[#allocation1] sm:$0xff pattern:$0x73625140]
        %727 = vrot.lane.b32.xlu0 %v726, 44
        %v728 = vpop.permute.xlu0 %727
        %vm730 = vcmask 519522
        %731 = vst.msk [vmem:[#allocation2 + $0x70] sm:$0xc] %vm730, %v728
        %s732 = scalar_lea.vmem [#allocation1], 2
        %733 = vst [vmem:[%s732] ss:$4 sm:$0xff] %v223
        %v734 = vld.sshfl [vmem:[#allocation1] sm:$0xff pattern:$0x73625140]
        %v735 = vld.sshfl [vmem:[#allocation1 + $0x8] sm:$0xff pattern:$0x73625140]
        %v736 = vld.sshfl [vmem:[#allocation1 + $0x10] sm:$0xff pattern:$0x73625140]
        %737 = vrot.lane.b32.xlu0 %v734, 107
        %v738 = vpop.permute.xlu0 %737
        %739 = vrot.lane.b32.xlu0 %v735, 107
        %v740 = vpop.permute.xlu0 %739
        %741 = vrot.lane.b32.xlu0 %v736, 107
        %v742 = vpop.permute.xlu0 %741
        %vm743 = vcmask 875520
        %v744 = vsel %vm743, %v738, %v740
        %v745 = vsel %vm743, %v740, %v742
        %749 = vst [vmem:[#allocation2 + $0x60] sm:$0x30] %v744
        %750 = vst [vmem:[#allocation2 + $0x68] sm:$0x30] %v745
        %vm751 = vcmask 349188
        %752 = vst.msk [vmem:[#allocation2 + $0x70] sm:$0x30] %vm751, %v742
        %s753 = scalar_lea.vmem [#allocation1], 2
        %754 = vst [vmem:[%s753] ss:$4 sm:$0xff] %v223
        %v755 = vld.sshfl [vmem:[#allocation1] sm:$0xff pattern:$0x73625140]
        %756 = vrot.lane.b32.xlu0 %v755, 43
        %v757 = vpop.permute.xlu0 %756
        %vm759 = vcmask 521564
        %760 = vst.msk [vmem:[#allocation2 + $0x70] sm:$0x30] %vm759, %v757
        %s761 = scalar_lea.vmem [#allocation1], 3
        %762 = vst [vmem:[%s761] ss:$4 sm:$0xff] %v223
        %v763 = vld.sshfl [vmem:[#allocation1] sm:$0xff pattern:$0x73625140]
        %v764 = vld.sshfl [vmem:[#allocation1 + $0x8] sm:$0xff pattern:$0x73625140]
        %v765 = vld.sshfl [vmem:[#allocation1 + $0x10] sm:$0xff pattern:$0x73625140]
        %766 = vrot.lane.b32.xlu0 %v763, 106
        %v767 = vpop.permute.xlu0 %766
        %768 = vrot.lane.b32.xlu0 %v764, 106
        %v769 = vpop.permute.xlu0 %768
        %770 = vrot.lane.b32.xlu0 %v765, 106
        %v771 = vpop.permute.xlu0 %770
        %vm772 = vcmask 867328
        %v773 = vsel %vm772, %v767, %v769
        %v774 = vsel %vm772, %v769, %v771
        %778 = vst [vmem:[#allocation2 + $0x60] sm:$0xc0] %v773
        %779 = vst [vmem:[#allocation2 + $0x68] sm:$0xc0] %v774
        %vm780 = vcmask 343046
        %781 = vst.msk [vmem:[#allocation2 + $0x70] sm:$0xc0] %vm780, %v771
        %s782 = scalar_lea.vmem [#allocation1], 3
        %783 = vst [vmem:[%s782] ss:$4 sm:$0xff] %v223
        %v784 = vld.sshfl [vmem:[#allocation1] sm:$0xff pattern:$0x73625140]
        %785 = vrot.lane.b32.xlu0 %v784, 42
        %v786 = vpop.permute.xlu0 %785
        %vm788 = vcmask 523606
        %789 = vst.msk [vmem:[#allocation2 + $0x70] sm:$0xc0] %vm788, %v786
        %790 = vst [vmem:[#allocation1] ss:$4 sm:$0xff] %v223
        %v791 = vld.sshfl [vmem:[#allocation1] sm:$0xff pattern:$0x73625140]
        %v792 = vld.sshfl [vmem:[#allocation1 + $0x8] sm:$0xff pattern:$0x73625140]
        %v793 = vld.sshfl [vmem:[#allocation1 + $0x10] sm:$0xff pattern:$0x73625140]
        %794 = vrot.lane.b32.xlu0 %v791, 90
        %v795 = vpop.permute.xlu0 %794
        %796 = vrot.lane.b32.xlu0 %v792, 90
        %v797 = vpop.permute.xlu0 %796
        %798 = vrot.lane.b32.xlu0 %v793, 90
        %v799 = vpop.permute.xlu0 %798
        %vm800 = vcmask 736256
        %v801 = vsel %vm800, %v795, %v797
        %v802 = vsel %vm800, %v797, %v799
        %806 = vst [vmem:[#allocation2 + $0x78] sm:$0x3] %v801
        %807 = vst [vmem:[#allocation2 + $0x80] sm:$0x3] %v802
        %vm808 = vcmask 205824
        %809 = vst.msk [vmem:[#allocation2 + $0x88] sm:$0x3] %vm808, %v799
        %810 = vst [vmem:[#allocation1] ss:$4 sm:$0xff] %v223
        %v811 = vld.sshfl [vmem:[#allocation1] sm:$0xff pattern:$0x73625140]
        %812 = vrot.lane.b32.xlu0 %v811, 26
        %v813 = vpop.permute.xlu0 %812
        %vm815 = vcmask 517328
        %816 = vst.msk [vmem:[#allocation2 + $0x88] sm:$0x3] %vm815, %v813
        %s817 = scalar_lea.vmem [#allocation1], 1
        %818 = vst [vmem:[%s817] ss:$4 sm:$0xff] %v223
        %v819 = vld.sshfl [vmem:[#allocation1] sm:$0xff pattern:$0x73625140]
        %v820 = vld.sshfl [vmem:[#allocation1 + $0x8] sm:$0xff pattern:$0x73625140]
        %v821 = vld.sshfl [vmem:[#allocation1 + $0x10] sm:$0xff pattern:$0x73625140]
        %822 = vrot.lane.b32.xlu0 %v819, 89
        %v823 = vpop.permute.xlu0 %822
        %824 = vrot.lane.b32.xlu0 %v820, 89
        %v825 = vpop.permute.xlu0 %824
        %826 = vrot.lane.b32.xlu0 %v821, 89
        %v827 = vpop.permute.xlu0 %826
        %vm828 = vcmask 728064
        %v829 = vsel %vm828, %v823, %v825
        %v830 = vsel %vm828, %v825, %v827
        %834 = vst [vmem:[#allocation2 + $0x78] sm:$0xc] %v829
        %835 = vst [vmem:[#allocation2 + $0x80] sm:$0xc] %v830
        %vm836 = vcmask 199682
        %837 = vst.msk [vmem:[#allocation2 + $0x88] sm:$0xc] %vm836, %v827
        %s838 = scalar_lea.vmem [#allocation1], 1
        %839 = vst [vmem:[%s838] ss:$4 sm:$0xff] %v223
        %v840 = vld.sshfl [vmem:[#allocation1] sm:$0xff pattern:$0x73625140]
        %841 = vrot.lane.b32.xlu0 %v840, 25
        %v842 = vpop.permute.xlu0 %841
        %vm844 = vcmask 519370
        %845 = vst.msk [vmem:[#allocation2 + $0x88] sm:$0xc] %vm844, %v842
        %s846 = scalar_lea.vmem [#allocation1], 2
        %847 = vst [vmem:[%s846] ss:$4 sm:$0xff] %v223
        %v848 = vld.sshfl [vmem:[#allocation1] sm:$0xff pattern:$0x73625140]
        %v849 = vld.sshfl [vmem:[#allocation1 + $0x8] sm:$0xff pattern:$0x73625140]
        %v850 = vld.sshfl [vmem:[#allocation1 + $0x10] sm:$0xff pattern:$0x73625140]
        %851 = vrot.lane.b32.xlu0 %v848, 88
        %v852 = vpop.permute.xlu0 %851
        %853 = vrot.lane.b32.xlu0 %v849, 88
        %v854 = vpop.permute.xlu0 %853
        %855 = vrot.lane.b32.xlu0 %v850, 88
        %v856 = vpop.permute.xlu0 %855
        %vm857 = vcmask 719872
        %v858 = vsel %vm857, %v852, %v854
        %v859 = vsel %vm857, %v854, %v856
        %863 = vst [vmem:[#allocation2 + $0x78] sm:$0x30] %v858
        %864 = vst [vmem:[#allocation2 + $0x80] sm:$0x30] %v859
        %vm865 = vcmask 193540
        %866 = vst.msk [vmem:[#allocation2 + $0x88] sm:$0x30] %vm865, %v856
        %s867 = scalar_lea.vmem [#allocation1], 2
        %868 = vst [vmem:[%s867] ss:$4 sm:$0xff] %v223
        %v869 = vld.sshfl [vmem:[#allocation1] sm:$0xff pattern:$0x73625140]
        %870 = vrot.lane.b32.xlu0 %v869, 24
        %v871 = vpop.permute.xlu0 %870
        %vm873 = vcmask 521412
        %874 = vst.msk [vmem:[#allocation2 + $0x88] sm:$0x30] %vm873, %v871
        %s875 = scalar_lea.vmem [#allocation1], 3
        %876 = vst [vmem:[%s875] ss:$4 sm:$0xff] %v223
        %v877 = vld.sshfl [vmem:[#allocation1] sm:$0xff pattern:$0x73625140]
        %v878 = vld.sshfl [vmem:[#allocation1 + $0x8] sm:$0xff pattern:$0x73625140]
        %v879 = vld.sshfl [vmem:[#allocation1 + $0x10] sm:$0xff pattern:$0x73625140]
        %880 = vrot.lane.b32.xlu0 %v877, 87
        %v881 = vpop.permute.xlu0 %880
        %882 = vrot.lane.b32.xlu0 %v878, 87
        %v883 = vpop.permute.xlu0 %882
        %884 = vrot.lane.b32.xlu0 %v879, 87
        %v885 = vpop.permute.xlu0 %884
        %vm886 = vcmask 711680
        %v887 = vsel %vm886, %v881, %v883
        %v888 = vsel %vm886, %v883, %v885
        %892 = vst [vmem:[#allocation2 + $0x78] sm:$0xc0] %v887
        %893 = vst [vmem:[#allocation2 + $0x80] sm:$0xc0] %v888
        %vm894 = vcmask 187398
        %895 = vst.msk [vmem:[#allocation2 + $0x88] sm:$0xc0] %vm894, %v885
        %s896 = scalar_lea.vmem [#allocation1], 3
        %897 = vst [vmem:[%s896] ss:$4 sm:$0xff] %v223
        %v898 = vld.sshfl [vmem:[#allocation1] sm:$0xff pattern:$0x73625140]
        %899 = vrot.lane.b32.xlu0 %v898, 23
        %v900 = vpop.permute.xlu0 %899
        %vm902 = vcmask 523454
        %903 = vst.msk [vmem:[#allocation2 + $0x88] sm:$0xc0] %vm902, %v900
        %904 = vst [vmem:[#allocation1] ss:$4 sm:$0xff] %v223
        %v905 = vld.sshfl [vmem:[#allocation1] sm:$0xff pattern:$0x73625140]
        %v906 = vld.sshfl [vmem:[#allocation1 + $0x8] sm:$0xff pattern:$0x73625140]
        %v907 = vld.sshfl [vmem:[#allocation1 + $0x10] sm:$0xff pattern:$0x73625140]
        %908 = vrot.lane.b32.xlu0 %v905, 86
        %v909 = vpop.permute.xlu0 %908
        %910 = vrot.lane.b32.xlu0 %v906, 86
        %v911 = vpop.permute.xlu0 %910
        %912 = vrot.lane.b32.xlu0 %v907, 86
        %v913 = vpop.permute.xlu0 %912
        %vm914 = vcmask 703488
        %v915 = vsel %vm914, %v909, %v911
        %v916 = vsel %vm914, %v911, %v913
        %920 = vst [vmem:[#allocation2 + $0x90] sm:$0x3] %v915
        %921 = vst [vmem:[#allocation2 + $0x98] sm:$0x3] %v916
        %vm922 = vcmask 173056
        %923 = vst.msk [vmem:[#allocation2 + $0xa0] sm:$0x3] %vm922, %v913
        %924 = vst [vmem:[#allocation1] ss:$4 sm:$0xff] %v223
        %v925 = vld.sshfl [vmem:[#allocation1] sm:$0xff pattern:$0x73625140]
        %926 = vrot.lane.b32.xlu0 %v925, 22
        %v927 = vpop.permute.xlu0 %926
        %vm929 = vcmask 517296
        %930 = vst.msk [vmem:[#allocation2 + $0xa0] sm:$0x3] %vm929, %v927
        %v931 = vld [vmem:[#allocation2] sm:$0xff]
        %v932 = vld [vmem:[#allocation2 + $0x8] sm:$0xff]
        %v933 = vld [vmem:[#allocation2 + $0x10] sm:$0xff]
        %v934 = vld [vmem:[#allocation2 + $0x18] sm:$0xff]
        %v935 = vld [vmem:[#allocation2 + $0x20] sm:$0xff]
        %v936 = vld [vmem:[#allocation2 + $0x28] sm:$0xff]
        %v937 = vld [vmem:[#allocation2 + $0x30] sm:$0xff]
        %v938 = vld [vmem:[#allocation2 + $0x38] sm:$0xff]
        %v939 = vld [vmem:[#allocation2 + $0x40] sm:$0xff]
        %v940 = vld [vmem:[#allocation2 + $0x48] sm:$0xff]
        %v941 = vld [vmem:[#allocation2 + $0x50] sm:$0xff]
        %v942 = vld [vmem:[#allocation2 + $0x58] sm:$0xff]
        %v943 = vld [vmem:[#allocation2 + $0x60] sm:$0xff]
        %v944 = vld [vmem:[#allocation2 + $0x68] sm:$0xff]
        %v945 = vld [vmem:[#allocation2 + $0x70] sm:$0xff]
        %v946 = vld [vmem:[#allocation2 + $0x78] sm:$0xff]
        %v947 = vld [vmem:[#allocation2 + $0x80] sm:$0xff]
        %v948 = vld [vmem:[#allocation2 + $0x88] sm:$0xff]
        %v949 = vld [vmem:[#allocation2 + $0x90] sm:$0xff]
        %v950 = vld [vmem:[#allocation2 + $0x98] sm:$0xff]
        %v951 = vld [vmem:[#allocation2 + $0xa0] sm:$0xff]
        %v952 = vld [vmem:[#allocation2 + $0xa8] sm:$0xff]
        %v953 = vld [vmem:[#allocation2 + $0xb0] sm:$0xff]
        %v954 = vld [vmem:[#allocation2 + $0xb8] sm:$0xff]
        %v955 = vld [vmem:[%s1] sm:$0xff]
        %v956 = vld [vmem:[%s1 + $0x8] sm:$0xff]
        %v957 = vld [vmem:[%s1 + $0x10] sm:$0xff]
        %v958 = vld [vmem:[%s1 + $0x18] sm:$0xff]
        %v959 = vld [vmem:[%s1 + $0x20] sm:$0xff]
        %v960 = vld [vmem:[%s1 + $0x28] sm:$0xff]
        %v961 = vld [vmem:[%s1 + $0x30] sm:$0xff]
        %v962 = vld [vmem:[%s1 + $0x38] sm:$0xff]
        %v963 = vld [vmem:[%s1 + $0x40] sm:$0xff]
        %v964 = vld [vmem:[%s1 + $0x48] sm:$0xff]
        %v965 = vld [vmem:[%s1 + $0x50] sm:$0xff]
        %v966 = vld [vmem:[%s1 + $0x58] sm:$0xff]
        %v967 = vld [vmem:[%s1 + $0x60] sm:$0x3]
        %v968 = vld [vmem:[%s2] sm:$0xff]
        %v969 = vld [vmem:[%s2 + $0x8] sm:$0xff]
        %v970 = vld [vmem:[%s2 + $0x10] sm:$0xff]
        %v971 = vld [vmem:[%s2 + $0x18] sm:$0xff]
        %v972 = vld [vmem:[%s2 + $0x20] sm:$0xff]
        %v973 = vld [vmem:[%s2 + $0x28] sm:$0xff]
        %v974 = vld [vmem:[%s2 + $0x30] sm:$0xff]
        %v975 = vld [vmem:[%s2 + $0x38] sm:$0xff]
        %v976 = vld [vmem:[%s2 + $0x40] sm:$0xff]
        %v977 = vld [vmem:[%s2 + $0x48] sm:$0xff]
        %v978 = vld [vmem:[%s2 + $0x50] sm:$0xff]
        %v979 = vld [vmem:[%s2 + $0x58] sm:$0xff]
        %v980 = vld [vmem:[%s2 + $0x60] sm:$0x3]
        %982 = vset.pattern.permute.xlu0 0
        %983 = vperm.xlu0 %982, %v968
        %v984 = vpop.permute.xlu0 %983
        %987 = vset.pattern.permute.xlu0 0
        %988 = vperm.xlu0 %987, %v969
        %v989 = vpop.permute.xlu0 %988
        %992 = vset.pattern.permute.xlu0 0
        %993 = vperm.xlu0 %992, %v970
        %v994 = vpop.permute.xlu0 %993
        %997 = vset.pattern.permute.xlu0 0
        %998 = vperm.xlu0 %997, %v971
        %v999 = vpop.permute.xlu0 %998
        %1002 = vset.pattern.permute.xlu0 0
        %1003 = vperm.xlu0 %1002, %v972
        %v1004 = vpop.permute.xlu0 %1003
        %1007 = vset.pattern.permute.xlu0 0
        %1008 = vperm.xlu0 %1007, %v973
        %v1009 = vpop.permute.xlu0 %1008
        %1012 = vset.pattern.permute.xlu0 0
        %1013 = vperm.xlu0 %1012, %v974
        %v1014 = vpop.permute.xlu0 %1013
        %1017 = vset.pattern.permute.xlu0 0
        %1018 = vperm.xlu0 %1017, %v975
        %v1019 = vpop.permute.xlu0 %1018
        %1022 = vset.pattern.permute.xlu0 0
        %1023 = vperm.xlu0 %1022, %v976
        %v1024 = vpop.permute.xlu0 %1023
        %1027 = vset.pattern.permute.xlu0 0
        %1028 = vperm.xlu0 %1027, %v977
        %v1029 = vpop.permute.xlu0 %1028
        %1032 = vset.pattern.permute.xlu0 0
        %1033 = vperm.xlu0 %1032, %v978
        %v1034 = vpop.permute.xlu0 %1033
        %1037 = vset.pattern.permute.xlu0 0
        %1038 = vperm.xlu0 %1037, %v979
        %v1039 = vpop.permute.xlu0 %1038
        %1042 = vset.pattern.permute.xlu0 0
        %1043 = vperm.xlu0 %1042, %v980
        %v1044 = vpop.permute.xlu0 %1043
        %v1047 = vsel %vm230, %v955, 0
        %v1050 = vsel %vm230, %v956, 0
        %v1053 = vsel %vm230, %v957, 0
        %v1056 = vsel %vm230, %v958, 0
        %v1059 = vsel %vm230, %v959, 0
        %v1062 = vsel %vm230, %v960, 0
        %v1065 = vsel %vm230, %v961, 0
        %v1068 = vsel %vm230, %v962, 0
        %v1071 = vsel %vm230, %v963, 0
        %v1074 = vsel %vm230, %v964, 0
        %v1077 = vsel %vm230, %v965, 0
        %v1080 = vsel %vm230, %v966, 0
        %v1083 = vsel %vm230, %v967, 0
        %1085 = vmatpush.msra.mxu0 0.0
        %1086 = vmatpush.msra.mxu0 0.0
        %1087 = vmatpush.msra.mxu0 0.0
        %1088 = vmatpush.msra.mxu0 0.0
        %1089 = vmatpush.msra.mxu0 0.0
        %1090 = vmatpush.msra.mxu0 0.0
        %1091 = vmatpush.msra.mxu0 0.0
        %1092 = vmatpush.msra.mxu0 0.0
        %1093 = vmatpush.msra.mxu0 %v952
        %1094 = vmatpush.msra.mxu0 %v949
        %1095 = vmatpush.msra.mxu0 %v946
        %1096 = vmatpush.msra.mxu0 %v943
        %1097 = vmatpush.msra.mxu0 %v940
        %1098 = vmatpush.msra.mxu0 %v937
        %1099 = vmatpush.msra.mxu0 %v934
        %1100 = vmatpush.msra.mxu0 %v931
        %1101 = vmatmul.f32.gmra.mxu0 %v1047
        %v1102 = vpop.f32.mrf.mxu0
        %v1103 = vadd.f32 %v984, %v1102
        %1104 = vmatmul.f32.gmra.mxu0 %v1050
        %v1105 = vpop.f32.mrf.mxu0
        %v1106 = vadd.f32 %v989, %v1105
        %1107 = vmatmul.f32.gmra.mxu0 %v1053
        %v1108 = vpop.f32.mrf.mxu0
        %v1109 = vadd.f32 %v994, %v1108
        %1110 = vmatmul.f32.gmra.mxu0 %v1056
        %v1111 = vpop.f32.mrf.mxu0
        %v1112 = vadd.f32 %v999, %v1111
        %1113 = vmatmul.f32.gmra.mxu0 %v1059
        %v1114 = vpop.f32.mrf.mxu0
        %v1115 = vadd.f32 %v1004, %v1114
        %1116 = vmatmul.f32.gmra.mxu0 %v1062
        %v1117 = vpop.f32.mrf.mxu0
        %v1118 = vadd.f32 %v1009, %v1117
        %1119 = vmatmul.f32.gmra.mxu0 %v1065
        %v1120 = vpop.f32.mrf.mxu0
        %v1121 = vadd.f32 %v1014, %v1120
        %1122 = vmatmul.f32.gmra.mxu0 %v1068
        %v1123 = vpop.f32.mrf.mxu0
        %v1124 = vadd.f32 %v1019, %v1123
        %1125 = vmatmul.f32.gmra.mxu0 %v1071
        %v1126 = vpop.f32.mrf.mxu0
        %v1127 = vadd.f32 %v1024, %v1126
        %1128 = vmatmul.f32.gmra.mxu0 %v1074
        %v1129 = vpop.f32.mrf.mxu0
        %v1130 = vadd.f32 %v1029, %v1129
        %1131 = vmatmul.f32.gmra.mxu0 %v1077
        %v1132 = vpop.f32.mrf.mxu0
        %v1133 = vadd.f32 %v1034, %v1132
        %1134 = vmatmul.f32.gmra.mxu0 %v1080
        %v1135 = vpop.f32.mrf.mxu0
        %v1136 = vadd.f32 %v1039, %v1135
        %1137 = vmatmul.f32.gmra.mxu0 %v1083
        %v1138 = vpop.f32.mrf.mxu0
        %v1139 = vadd.f32 %v1044, %v1138
        %1140 = vdwg.mxu0
        %1141 = vmatpush.msra.mxu0 0.0
        %1142 = vmatpush.msra.mxu0 0.0
        %1143 = vmatpush.msra.mxu0 0.0
        %1144 = vmatpush.msra.mxu0 0.0
        %1145 = vmatpush.msra.mxu0 0.0
        %1146 = vmatpush.msra.mxu0 0.0
        %1147 = vmatpush.msra.mxu0 0.0
        %1148 = vmatpush.msra.mxu0 0.0
        %1149 = vmatpush.msra.mxu0 %v953
        %1150 = vmatpush.msra.mxu0 %v950
        %1151 = vmatpush.msra.mxu0 %v947
        %1152 = vmatpush.msra.mxu0 %v944
        %1153 = vmatpush.msra.mxu0 %v941
        %1154 = vmatpush.msra.mxu0 %v938
        %1155 = vmatpush.msra.mxu0 %v935
        %1156 = vmatpush.msra.mxu0 %v932
        %1157 = vmatmul.f32.gmra.mxu0 %v1047
        %v1158 = vpop.f32.mrf.mxu0
        %v1159 = vadd.f32 %v984, %v1158
        %1160 = vmatmul.f32.gmra.mxu0 %v1050
        %v1161 = vpop.f32.mrf.mxu0
        %v1162 = vadd.f32 %v989, %v1161
        %1163 = vmatmul.f32.gmra.mxu0 %v1053
        %v1164 = vpop.f32.mrf.mxu0
        %v1165 = vadd.f32 %v994, %v1164
        %1166 = vmatmul.f32.gmra.mxu0 %v1056
        %v1167 = vpop.f32.mrf.mxu0
        %v1168 = vadd.f32 %v999, %v1167
        %1169 = vmatmul.f32.gmra.mxu0 %v1059
        %v1170 = vpop.f32.mrf.mxu0
        %v1171 = vadd.f32 %v1004, %v1170
        %1172 = vmatmul.f32.gmra.mxu0 %v1062
        %v1173 = vpop.f32.mrf.mxu0
        %v1174 = vadd.f32 %v1009, %v1173
        %1175 = vmatmul.f32.gmra.mxu0 %v1065
        %v1176 = vpop.f32.mrf.mxu0
        %v1177 = vadd.f32 %v1014, %v1176
        %1178 = vmatmul.f32.gmra.mxu0 %v1068
        %v1179 = vpop.f32.mrf.mxu0
        %v1180 = vadd.f32 %v1019, %v1179
        %1181 = vmatmul.f32.gmra.mxu0 %v1071
        %v1182 = vpop.f32.mrf.mxu0
        %v1183 = vadd.f32 %v1024, %v1182
        %1184 = vmatmul.f32.gmra.mxu0 %v1074
        %v1185 = vpop.f32.mrf.mxu0
        %v1186 = vadd.f32 %v1029, %v1185
        %1187 = vmatmul.f32.gmra.mxu0 %v1077
        %v1188 = vpop.f32.mrf.mxu0
        %v1189 = vadd.f32 %v1034, %v1188
        %1190 = vmatmul.f32.gmra.mxu0 %v1080
        %v1191 = vpop.f32.mrf.mxu0
        %v1192 = vadd.f32 %v1039, %v1191
        %1193 = vmatmul.f32.gmra.mxu0 %v1083
        %v1194 = vpop.f32.mrf.mxu0
        %v1195 = vadd.f32 %v1044, %v1194
        %1196 = vdwg.mxu0
        %1197 = vmatpush.msra.mxu0 0.0
        %1198 = vmatpush.msra.mxu0 0.0
        %1199 = vmatpush.msra.mxu0 0.0
        %1200 = vmatpush.msra.mxu0 0.0
        %1201 = vmatpush.msra.mxu0 0.0
        %1202 = vmatpush.msra.mxu0 0.0
        %1203 = vmatpush.msra.mxu0 0.0
        %1204 = vmatpush.msra.mxu0 0.0
        %1205 = vmatpush.msra.mxu0 %v954
        %1206 = vmatpush.msra.mxu0 %v951
        %1207 = vmatpush.msra.mxu0 %v948
        %1208 = vmatpush.msra.mxu0 %v945
        %1209 = vmatpush.msra.mxu0 %v942
        %1210 = vmatpush.msra.mxu0 %v939
        %1211 = vmatpush.msra.mxu0 %v936
        %1212 = vmatpush.msra.mxu0 %v933
        %1213 = vmatmul.f32.gmra.mxu0 %v1047
        %v1214 = vpop.f32.mrf.mxu0
        %v1215 = vadd.f32 %v984, %v1214
        %1216 = vmatmul.f32.gmra.mxu0 %v1050
        %v1217 = vpop.f32.mrf.mxu0
        %v1218 = vadd.f32 %v989, %v1217
        %1219 = vmatmul.f32.gmra.mxu0 %v1053
        %v1220 = vpop.f32.mrf.mxu0
        %v1221 = vadd.f32 %v994, %v1220
        %1222 = vmatmul.f32.gmra.mxu0 %v1056
        %v1223 = vpop.f32.mrf.mxu0
        %v1224 = vadd.f32 %v999, %v1223
        %1225 = vmatmul.f32.gmra.mxu0 %v1059
        %v1226 = vpop.f32.mrf.mxu0
        %v1227 = vadd.f32 %v1004, %v1226
        %1228 = vmatmul.f32.gmra.mxu0 %v1062
        %v1229 = vpop.f32.mrf.mxu0
        %v1230 = vadd.f32 %v1009, %v1229
        %1231 = vmatmul.f32.gmra.mxu0 %v1065
        %v1232 = vpop.f32.mrf.mxu0
        %v1233 = vadd.f32 %v1014, %v1232
        %1234 = vmatmul.f32.gmra.mxu0 %v1068
        %v1235 = vpop.f32.mrf.mxu0
        %v1236 = vadd.f32 %v1019, %v1235
        %1237 = vmatmul.f32.gmra.mxu0 %v1071
        %v1238 = vpop.f32.mrf.mxu0
        %v1239 = vadd.f32 %v1024, %v1238
        %1240 = vmatmul.f32.gmra.mxu0 %v1074
        %v1241 = vpop.f32.mrf.mxu0
        %v1242 = vadd.f32 %v1029, %v1241
        %1243 = vmatmul.f32.gmra.mxu0 %v1077
        %v1244 = vpop.f32.mrf.mxu0
        %v1245 = vadd.f32 %v1034, %v1244
        %1246 = vmatmul.f32.gmra.mxu0 %v1080
        %v1247 = vpop.f32.mrf.mxu0
        %v1248 = vadd.f32 %v1039, %v1247
        %1249 = vmatmul.f32.gmra.mxu0 %v1083
        %v1250 = vpop.f32.mrf.mxu0
        %v1251 = vadd.f32 %v1044, %v1250
        %1252 = vdwg.mxu0
        %v1253 = vmul.f32 %v1103, %v1115
        %v1254 = vmul.f32 %v1159, %v1171
        %v1255 = vmul.f32 %v1215, %v1227
        %v1256 = vmul.f32 %v1106, %v1118
        %v1257 = vmul.f32 %v1162, %v1174
        %v1258 = vmul.f32 %v1218, %v1230
        %v1259 = vmul.f32 %v1109, %v1121
        %v1260 = vmul.f32 %v1165, %v1177
        %v1261 = vmul.f32 %v1221, %v1233
        %v1262 = vmul.f32 %v1112, %v1124
        %v1263 = vmul.f32 %v1168, %v1180
        %v1264 = vmul.f32 %v1224, %v1236
        %v1265 = vmul.f32 %v1253, %v1127
        %v1266 = vmul.f32 %v1254, %v1183
        %v1267 = vmul.f32 %v1255, %v1239
        %v1268 = vmul.f32 %v1256, %v1130
        %v1269 = vmul.f32 %v1257, %v1186
        %v1270 = vmul.f32 %v1258, %v1242
        %v1271 = vmul.f32 %v1259, %v1133
        %v1272 = vmul.f32 %v1260, %v1189
        %v1273 = vmul.f32 %v1261, %v1245
        %v1274 = vmul.f32 %v1262, %v1136
        %v1275 = vmul.f32 %v1263, %v1192
        %v1276 = vmul.f32 %v1264, %v1248
        %v1277 = vld [vmem:[%s3] sm:$0x3]
        %v1278 = vld [vmem:[%s4] sm:$0x3]
        %1280 = vset.pattern.permute.xlu0 0
        %1281 = vperm.xlu0 %1280, %v1278
        %v1282 = vpop.permute.xlu0 %1281
        %vm1284 = vcmask 261120
        %v1286 = vsel %vm1284, %v1277, 0
        %1288 = vmatpush.msra.mxu0 0.0
        %1289 = vmatpush.msra.mxu0 0.0
        %1290 = vmatpush.msra.mxu0 0.0
        %1291 = vmatpush.msra.mxu0 0.0
        %1292 = vmatpush.msra.mxu0 0.0
        %1293 = vmatpush.msra.mxu0 0.0
        %1294 = vmatpush.msra.mxu0 0.0
        %1295 = vmatpush.msra.mxu0 0.0
        %1296 = vmatpush.msra.mxu0 0.0
        %1297 = vmatpush.msra.mxu0 0.0
        %1298 = vmatpush.msra.mxu0 0.0
        %1299 = vmatpush.msra.mxu0 0.0
        %1300 = vmatpush.msra.mxu0 %v1274
        %1301 = vmatpush.msra.mxu0 %v1271
        %1302 = vmatpush.msra.mxu0 %v1268
        %1303 = vmatpush.msra.mxu0 %v1265
        %1304 = vmatmul.f32.gmra.mxu0 %v1286
        %v1305 = vpop.f32.mrf.mxu0
        %v1306 = vadd.f32 %v1282, %v1305
        %1307 = vdwg.mxu0
        %1308 = vmatpush.msra.mxu0 0.0
        %1309 = vmatpush.msra.mxu0 0.0
        %1310 = vmatpush.msra.mxu0 0.0
        %1311 = vmatpush.msra.mxu0 0.0
        %1312 = vmatpush.msra.mxu0 0.0
        %1313 = vmatpush.msra.mxu0 0.0
        %1314 = vmatpush.msra.mxu0 0.0
        %1315 = vmatpush.msra.mxu0 0.0
        %1316 = vmatpush.msra.mxu0 0.0
        %1317 = vmatpush.msra.mxu0 0.0
        %1318 = vmatpush.msra.mxu0 0.0
        %1319 = vmatpush.msra.mxu0 0.0
        %1320 = vmatpush.msra.mxu0 %v1275
        %1321 = vmatpush.msra.mxu0 %v1272
        %1322 = vmatpush.msra.mxu0 %v1269
        %1323 = vmatpush.msra.mxu0 %v1266
        %1324 = vmatmul.f32.gmra.mxu0 %v1286
        %v1325 = vpop.f32.mrf.mxu0
        %v1326 = vadd.f32 %v1282, %v1325
        %1327 = vdwg.mxu0
        %1328 = vmatpush.msra.mxu0 0.0
        %1329 = vmatpush.msra.mxu0 0.0
        %1330 = vmatpush.msra.mxu0 0.0
        %1331 = vmatpush.msra.mxu0 0.0
        %1332 = vmatpush.msra.mxu0 0.0
        %1333 = vmatpush.msra.mxu0 0.0
        %1334 = vmatpush.msra.mxu0 0.0
        %1335 = vmatpush.msra.mxu0 0.0
        %1336 = vmatpush.msra.mxu0 0.0
        %1337 = vmatpush.msra.mxu0 0.0
        %1338 = vmatpush.msra.mxu0 0.0
        %1339 = vmatpush.msra.mxu0 0.0
        %1340 = vmatpush.msra.mxu0 %v1276
        %1341 = vmatpush.msra.mxu0 %v1273
        %1342 = vmatpush.msra.mxu0 %v1270
        %1343 = vmatpush.msra.mxu0 %v1267
        %1344 = vmatmul.f32.gmra.mxu0 %v1286
        %v1345 = vpop.f32.mrf.mxu0
        %v1346 = vadd.f32 %v1282, %v1345
        %1347 = vdwg.mxu0
        %v1348 = vadd.f32 %v1139, %v1306
        %v1349 = vadd.f32 %v1195, %v1326
        %v1350 = vadd.f32 %v1251, %v1346
        %v1351 = vmul.f32 %v1348, 0.00025
        %v1352 = vmul.f32 %v1349, 0.00025
        %v1353 = vmul.f32 %v1350, 0.00025
        %v1357 = vrot.slane %v1352, 6
        %v1358 = vrot.slane %v1353, 4
        %vm1359 = vcmask 1041408
        %v1360 = vsel %vm1359, %v1351, %v1357
        %vm1361 = vcmask 1043456
        %v1362 = vsel %vm1361, %v1360, %v1358
        %v1364 = vadd.f32 %v223, %v1362
        %vm1365 = vcmask 1043458
        %vm1366 = vmor %vm1365, %vm1359
        %vm1367 = vmor %vm319, %vm1366
        %1368 = vst.msk [vmem:[%s217] sm:$0x3f] %vm1367, %v1364
        %s1369 = sand.u32 %s137, 1
        %s1370 = scalar_lea.sflag [#allocation4], %s1369
        %s1371 = sand.u32 %s137, 1
        %s1372 = smul.addr %s1371, 6
        %s1373 = scalar_lea.vmem [#allocation3], %s1372
        // Predicated region
        $region41: #{tpu_custom_call.1} parent=39 // pred_check
          %p1374 = pneg %p147
        $region42: #{tpu_custom_call.1} parent=39 // pred_check_branch
          %1376 = sbr.rel (%p1374) target = $region44
        $region43: #{tpu_custom_call.1} parent=39 // pred_region
          %1378 = vsyncadd %s1370, 0
          %s1379 = smul.addr %s19, 3
          %s1380 = smul.addr %s1379, 2
          %s1381 = scalar_lea.hbm %s5, %s1380
          %s1383 = sshll.u32 %s1373, 4
          %s1384 = int_to_ptr.vmem [resolvable:$true] %s1383
          %s1385 = sshll.u32 %s1381, 4
          %s1386 = int_to_ptr.hbm [resolvable:$true] %s1385
          %1388 = dma.vmem_to_hbm [thread:$0]  %s1384, 96, %s1386, %s1370
        $region44: #{tpu_custom_call.1} parent=39 // pred_fallthru
          _
      $region40: #{tpu_custom_call.1} parent=5 // pred_fallthru
        _
      %p1389 = scmp.le.s32.totalorder 2, %s14
      // Predicated region
      $region45: #{tpu_custom_call.1} parent=5 // pred_check
        %p1390 = pneg %p1389
      $region46: #{tpu_custom_call.1} parent=5 // pred_check_branch
        %1392 = sbr.rel (%p1390) target = $region48
      $region47: #{tpu_custom_call.1} parent=5 // pred_region
        %s1393 = ssub.s32 %s14, 2
        // Predicated region
        $region49: #{tpu_custom_call.1} parent=47 // pred_check
          %p1394 = pneg %p153
        $region50: #{tpu_custom_call.1} parent=47 // pred_check_branch
          %1396 = sbr.rel (%p1394) target = $region52
        $region51: #{tpu_custom_call.1} parent=47 // pred_region
          %s1397 = sand.u32 %s138, 1
          %s1398 = scalar_lea.sflag [#allocation4], %s1397
          %s1399 = sand.u32 %s138, 1
          %s1400 = smul.addr %s1399, 6
          %s1401 = scalar_lea.vmem [#allocation3], %s1400
          %1403 = dma.done %s1398, 96
        $region52: #{tpu_custom_call.1} parent=47 // pred_fallthru
          _
      $region48: #{tpu_custom_call.1} parent=5 // pred_fallthru
        _
    $region6: #{tpu_custom_call.1} parent=1 // loop_footer
      %s18 = sadd.s32 1, %s14
    $region7: #{tpu_custom_call.1} parent=1 // loop_footer_branch
      %13 = sbr.rel target = $region3
    $region8: #{tpu_custom_call.1} parent=1 // loop_exit
      _
    %1404 = vsyncpa [#allocation4], 1
    %s1405 = scalar_lea.sflag [#allocation4], 1
    %1406 = vsyncpa %s1405, 1

</llo_original>
